<compile_context>
chip_gen: v7x
topology: tpu7x:2x2x1
jax: 0.10.0
libtpu: 0.0.40
codegen_flags: <defaults>
</compile_context>

<pallas_src>
import functools

import jax
import jax.numpy as jnp
from jax.experimental import pallas as pl
from jax.experimental.pallas import tpu as pltpu


# ------------------------------ kernel --------------------------------------


def _fused_attention_kernel(*refs, num_heads, scale, tq, has_mask):
    if has_mask:
        (x_ref, w_qkv_ref, w_proj_ref, b_ref, mask_ref, o_ref,
         kv_scratch, ctx_scratch) = refs
    else:
        (x_ref, w_qkv_ref, w_proj_ref, b_ref, o_ref,
         kv_scratch, ctx_scratch) = refs
        mask_ref = None

    _, N, C = x_ref.shape
    H = num_heads
    D = C // H
    qt = pl.program_id(1)

    # ---- k/v projection: once per batch (first query tile), kept bf16 in
    #      VMEM scratch and re-used by all query tiles of this batch ----
    @pl.when(qt == 0)
    def _():
        x_full = x_ref[0]                                    # (N, C)  bf16
        w_kv = w_qkv_ref[:, C:3 * C]                         # (C, 2C) bf16
        kv = jnp.dot(x_full, w_kv,
                     preferred_element_type=jnp.float32)     # (N, 2C) f32
        kv_scratch[...] = kv.astype(jnp.bfloat16)

    # ---- q projection for this query tile (scale folded in, single cast) ----
    row0 = pl.multiple_of(qt * tq, tq)
    x_rows = x_ref[0, pl.ds(row0, tq), :]                    # (tq, C) bf16
    q = jnp.dot(x_rows, w_qkv_ref[:, 0:C],
                preferred_element_type=jnp.float32) * scale  # (tq, C) f32
    q_bf = q.astype(jnp.bfloat16)                            # one cast pass

    if has_mask:
        # bias built once per tile, kept in f32 (exp underflow relies on it)
        neg_mask = mask_ref[0].astype(jnp.float32) * (-100000.0)   # (tq, N)

    # ---- per-head scaled-dot-product attention ----
    # Contract dim D of both operands: s = (q*scale) @ k^T without a k.T copy.
    dim_nums = (((1,), (1,)), ((), ()))
    for h in range(H):
        lo, hi = h * D, (h + 1) * D
        qh = q_bf[:, lo:hi]                                  # (tq, D) bf16
        kh = kv_scratch[:, lo:hi]                            # (N, D)  bf16
        vh = kv_scratch[:, C + lo:C + hi]                    # (N, D)  bf16

        s = jax.lax.dot_general(qh, kh, dim_nums,
                                preferred_element_type=jnp.float32)  # (tq, N)
        if has_mask:
            s = s + neg_mask
        # Numerically-stable softmax; statistics in f32, recip on the EUP.
        s = s - jnp.max(s, axis=-1, keepdims=True)
        p = jnp.exp(s)
        p = p * pl.reciprocal(jnp.sum(p, axis=-1, keepdims=True), approx=True)
        ctx_h = jnp.dot(p.astype(jnp.bfloat16), vh,
                        preferred_element_type=jnp.float32)  # (tq, D) f32
        # Static column write into VMEM scratch: no concatenate / relayout,
        # head live range ends here.
        ctx_scratch[:, lo:hi] = ctx_h.astype(jnp.bfloat16)

    # ---- output projection: one big MXU matmul with full-C contraction ----
    out = jnp.dot(ctx_scratch[...], w_proj_ref[...],
                  preferred_element_type=jnp.float32) + b_ref[...]   # (tq, C)
    o_ref[...] = out[None].astype(o_ref.dtype)


# ------------------------------ wrapper -------------------------------------


def _pick_query_tile(n, max_tile=256):
    """Largest multiple-of-8 divisor of n that is <= max_tile, else n."""
    if n <= max_tile:
        return n
    best = None
    t = 8
    while t <= max_tile:
        if n % t == 0:
            best = t
        t += 8
    return best if best is not None else n


def attention_forward(x, w_qkv, w_proj, b_proj, num_heads, mask=None):
    """Forward pass equivalent to the PyTorch Attention module (eval mode).

    x:      (B, N, C) float32
    w_qkv:  (C, 3C)   float32   (qkv_bias=False per module default)
    w_proj: (C, C)    float32
    b_proj: (C,)      float32
    mask:   optional (B, N, N); added to attention logits as mask * -100000.0
    Returns (B, N, C) float32.
    """
    B, N, C = x.shape
    assert C % num_heads == 0, "dim must be divisible by num_heads"
    D = C // num_heads
    scale = D ** (-0.5)
    has_mask = mask is not None

    tq = _pick_query_tile(N)
    nq = N // tq

    # bf16 MXU inputs (halves HBM/VMEM traffic); accumulation stays f32.
    x_bf = x.astype(jnp.bfloat16)
    w_qkv_bf = w_qkv.astype(jnp.bfloat16)
    w_proj_bf = w_proj.astype(jnp.bfloat16)
    b2 = b_proj.reshape(1, C).astype(jnp.float32)

    kernel = functools.partial(
        _fused_attention_kernel, num_heads=num_heads, scale=scale,
        tq=tq, has_mask=has_mask)

    in_specs = [
        # x: full per-batch block; constant index over the q-tile axis so it
        # is DMA'd once per batch and re-used by every query tile.
        pl.BlockSpec((1, N, C), lambda b, q: (b, 0, 0)),
        pl.BlockSpec((C, 3 * C), lambda b, q: (0, 0)),    # w_qkv: resident
        pl.BlockSpec((C, C), lambda b, q: (0, 0)),        # w_proj: resident
        pl.BlockSpec((1, C), lambda b, q: (0, 0)),        # b_proj: resident
    ]
    args = [x_bf, w_qkv_bf, w_proj_bf, b2]
    if has_mask:
        # mask DMA'd per query tile in bf16 (0/1 values exact); bias math f32.
        in_specs.append(pl.BlockSpec((1, tq, N), lambda b, q: (b, q, 0)))
        args.append(mask.astype(jnp.bfloat16))

    # Scoped-VMEM budget: resident weights + double-buffered tiles + scratch
    # + in-kernel f32 intermediates, with 2x margin (v5e default is 16 MiB).
    est = (2 * (N * C) * 2                       # x block (bf16), 2 buffers
           + 2 * (3 * C * C) * 2                 # w_qkv bf16
           + 2 * (C * C) * 2                     # w_proj bf16
           + 2 * C * 4                           # bias f32
           + (2 * tq * N * 2 if has_mask else 0)  # mask bf16
           + 2 * tq * C * 4                      # out f32
           + N * 2 * C * 2 + tq * C * 2          # kv / ctx scratch (bf16)
           + 3 * tq * N * 4                      # scores / exp f32
           + 2 * tq * C * 4                      # q / out intermediates f32
           + N * 2 * C * 4)                      # kv f32 before cast
    vmem_limit = int(min(64 * 2 ** 20, max(32 * 2 ** 20, 2 * est)))

    return pl.pallas_call(
        kernel,
        out_shape=jax.ShapeDtypeStruct((B, N, C), jnp.float32),
        grid=(B, nq),
        in_specs=in_specs,
        out_specs=pl.BlockSpec((1, tq, C), lambda b, q: (b, q, 0)),
        scratch_shapes=[
            pltpu.VMEM((N, 2 * C), jnp.bfloat16),   # k|v, persists per batch
            pltpu.VMEM((tq, C), jnp.bfloat16),      # merged-head context
        ],
        compiler_params=pltpu.CompilerParams(
            dimension_semantics=("parallel", "arbitrary"),
            vmem_limit_bytes=vmem_limit),
    )(*args)


# ----------------------------- reference ------------------------------------


def attention_reference(x, w_qkv, w_proj, b_proj, num_heads, mask=None):
    B, N, C = x.shape
    H = num_heads
    D = C // H
    scale = D ** (-0.5)
    qkv = (x @ w_qkv).reshape(B, N, 3, H, D).transpose(2, 0, 3, 1, 4)
    q, k, v = qkv[0], qkv[1], qkv[2]
    attn = jnp.einsum("bhnd,bhmd->bhnm", q, k) * scale
    if mask is not None:
        attn = attn + (mask * -100000.0)[:, None, :, :]
    attn = jax.nn.softmax(attn, axis=-1)
    ctx = jnp.einsum("bhnm,bhmd->bhnd", attn, v)
    ctx = ctx.transpose(0, 2, 1, 3).reshape(B, N, C)
    return ctx @ w_proj + b_proj


# -------------------------------- main ---------------------------------------


if __name__ == "__main__":
    # Small correctness shapes (real benchmarking should use N >= 128 and C a
    # multiple of 128, e.g. ViT-B: N=197..1024, C=768, heads=12).
    B, N, C = 2, 8, 32
    num_heads = 8

    key = jax.random.PRNGKey(0)
    kx, kq, kp, kb, km = jax.random.split(key, 5)

    x = jax.random.normal(kx, (B, N, C), dtype=jnp.float32)
    # Deterministic parameter init (qkv_bias=False per module default).
    w_qkv = jax.random.normal(kq, (C, 3 * C), dtype=jnp.float32) * 0.05
    w_proj = jax.random.normal(kp, (C, C), dtype=jnp.float32) * 0.05
    b_proj = jax.random.normal(kb, (C,), dtype=jnp.float32) * 0.05
    # Optional additive mask, shape (B, N, N); 0/1 entries as in typical usage.
    mask = (jax.random.uniform(km, (B, N, N)) > 0.8).astype(jnp.float32)

    out = jax.block_until_ready(
        attention_forward(x, w_qkv, w_proj, b_proj, num_heads, mask=mask))
    ref = attention_reference(x, w_qkv, w_proj, b_proj, num_heads, mask=mask)
    assert out.shape == (B, N, C)
    # bf16 MXU inputs with f32 accumulation -> compare at bf16-level tolerance.
    assert jnp.allclose(out, ref, atol=2e-2, rtol=2e-2), "mismatch (masked)"

    # Also exercise the mask=None kernel variant (matches torch `mask=None`).
    out_nm = jax.block_until_ready(
        attention_forward(x, w_qkv, w_proj, b_proj, num_heads, mask=None))
    ref_nm = attention_reference(x, w_qkv, w_proj, b_proj, num_heads, mask=None)
    assert jnp.allclose(out_nm, ref_nm, atol=2e-2, rtol=2e-2), "mismatch (no mask)"

    print("KERNEL_OK")
</pallas_src>

<mosaic_0001>
module attributes {stable_mosaic.version = 11 : i64} {
  func.func @_fused_attention_kernel(%arg0: i32, %arg1: i32, %arg2: memref<1x8x32xbf16, #tpu.memory_space<vmem>>, %arg3: memref<32x96xbf16, #tpu.memory_space<vmem>>, %arg4: memref<32x32xbf16, #tpu.memory_space<vmem>>, %arg5: memref<1x32xf32, #tpu.memory_space<vmem>>, %arg6: memref<1x8x8xbf16, #tpu.memory_space<vmem>>, %arg7: memref<1x8x32xf32, #tpu.memory_space<vmem>>, %arg8: memref<8x64xbf16, #tpu.memory_space<vmem>>, %arg9: memref<8x32xbf16, #tpu.memory_space<vmem>>) attributes {dimension_semantics = [#tpu.dimension_semantics<parallel>, #tpu.dimension_semantics<arbitrary>], iteration_bounds = array<i64: 2, 1>, scalar_prefetch = 0 : i64, scratch_operands = 2 : i64, tpu.core_type = #tpu.core_type<tc>, window_params = [{transform_indices = @transform_0, window_bounds = array<i64: 1, 8, 32>}, {pipeline_mode = #tpu.pipeline_mode<synchronous>, transform_indices = @transform_1, window_bounds = array<i64: 32, 96>}, {pipeline_mode = #tpu.pipeline_mode<synchronous>, transform_indices = @transform_2, window_bounds = array<i64: 32, 32>}, {pipeline_mode = #tpu.pipeline_mode<synchronous>, transform_indices = @transform_3, window_bounds = array<i64: 1, 32>}, {transform_indices = @transform_4, window_bounds = array<i64: 1, 8, 8>}, {transform_indices = @transform_5, window_bounds = array<i64: 1, 8, 32>}]} {
    %c0_i32 = arith.constant 0 : i32
    %0 = arith.cmpi eq, %arg1, %c0_i32 : i32
    %1 = arith.extui %0 : i1 to i32
    %c0_i32_0 = arith.constant 0 : i32
    %2 = arith.cmpi ne, %1, %c0_i32_0 : i32
    scf.if %2 {
      %c0_84 = arith.constant 0 : index
      %c0_85 = arith.constant 0 : index
      %c0_86 = arith.constant 0 : index
      %178 = vector.load %arg2[%c0_84, %c0_85, %c0_86] : memref<1x8x32xbf16, #tpu.memory_space<vmem>>, vector<1x8x32xbf16>
      %179 = vector.shape_cast %178 : vector<1x8x32xbf16> to vector<8x32xbf16>
      %c0_87 = arith.constant 0 : index
      %c32_88 = arith.constant 32 : index
      %180 = vector.load %arg3[%c0_87, %c32_88] : memref<32x96xbf16, #tpu.memory_space<vmem>>, vector<32x64xbf16>
      %cst_89 = arith.constant dense<0.000000e+00> : vector<8x64xf32>
      %181 = tpu.matmul %179, %180, %cst_89 {dimension_numbers = #tpu.dot_dimension_numbers<[1], [0], [0], [1], [0, 0, 1, 1], [], []>} : vector<8x32xbf16>, vector<32x64xbf16>, vector<8x64xf32> -> vector<8x64xf32>
      %182 = arith.truncf %181 : vector<8x64xf32> to vector<8x64xbf16>
      %c0_90 = arith.constant 0 : index
      %c0_91 = arith.constant 0 : index
      %183 = vector.load %arg8[%c0_90, %c0_91] : memref<8x64xbf16, #tpu.memory_space<vmem>>, vector<8x64xbf16>
      tpu.vector_store %arg8[%c0_90, %c0_91], %182 {strides = array<i32>} : memref<8x64xbf16, #tpu.memory_space<vmem>>, vector<8x64xbf16>,
    } else {
    }
    %c8_i32 = arith.constant 8 : i32
    %3 = arith.muli %arg1, %c8_i32 : i32
    %4 = tpu.assume_multiple %3, 8 : i32
    %c0 = arith.constant 0 : index
    %5 = arith.index_cast %4 : i32 to index
    %c0_1 = arith.constant 0 : index
    %6 = vector.load %arg2[%c0, %5, %c0_1] : memref<1x8x32xbf16, #tpu.memory_space<vmem>>, vector<1x8x32xbf16>
    %7 = vector.shape_cast %6 : vector<1x8x32xbf16> to vector<8x32xbf16>
    %c0_2 = arith.constant 0 : index
    %c0_3 = arith.constant 0 : index
    %8 = vector.load %arg3[%c0_2, %c0_3] : memref<32x96xbf16, #tpu.memory_space<vmem>>, vector<32x32xbf16>
    %cst = arith.constant dense<0.000000e+00> : vector<8x32xf32>
    %9 = tpu.matmul %7, %8, %cst {dimension_numbers = #tpu.dot_dimension_numbers<[1], [0], [0], [1], [0, 0, 1, 1], [], []>} : vector<8x32xbf16>, vector<32x32xbf16>, vector<8x32xf32> -> vector<8x32xf32>
    %cst_4 = arith.constant 5.000000e-01 : f32
    %10 = vector.broadcast %cst_4 : f32 to vector<8x32xf32>
    %11 = arith.mulf %9, %10 : vector<8x32xf32>
    %12 = arith.truncf %11 : vector<8x32xf32> to vector<8x32xbf16>
    %c0_5 = arith.constant 0 : index
    %c0_6 = arith.constant 0 : index
    %c0_7 = arith.constant 0 : index
    %13 = vector.load %arg6[%c0_5, %c0_6, %c0_7] : memref<1x8x8xbf16, #tpu.memory_space<vmem>>, vector<1x8x8xbf16>
    %14 = vector.shape_cast %13 : vector<1x8x8xbf16> to vector<8x8xbf16>
    %15 = arith.extf %14 : vector<8x8xbf16> to vector<8x8xf32>
    %cst_8 = arith.constant -1.000000e+05 : f32
    %16 = vector.broadcast %cst_8 : f32 to vector<8x8xf32>
    %17 = arith.mulf %15, %16 : vector<8x8xf32>
    %18 = vector.extract_strided_slice %12 {offsets = [0, 0], sizes = [8, 4], strides = [1, 1]} : vector<8x32xbf16> to vector<8x4xbf16>
    %c0_9 = arith.constant 0 : index
    %c0_10 = arith.constant 0 : index
    %19 = vector.load %arg8[%c0_9, %c0_10] : memref<8x64xbf16, #tpu.memory_space<vmem>>, vector<8x4xbf16>
    %c0_11 = arith.constant 0 : index
    %c32 = arith.constant 32 : index
    %20 = vector.load %arg8[%c0_11, %c32] : memref<8x64xbf16, #tpu.memory_space<vmem>>, vector<8x4xbf16>
    %cst_12 = arith.constant dense<0.000000e+00> : vector<8x8xf32>
    %21 = tpu.matmul %18, %19, %cst_12 {dimension_numbers = #tpu.dot_dimension_numbers<[1], [1], [0], [0], [0, 0, 1, 0], [], []>} : vector<8x4xbf16>, vector<8x4xbf16>, vector<8x8xf32> -> vector<8x8xf32>
    %22 = arith.addf %21, %17 : vector<8x8xf32>
    %cst_13 = arith.constant dense<0xFF800000> : vector<8xf32>
    %23 = vector.multi_reduction <maximumf>, %22, %cst_13 [1] : vector<8x8xf32> to vector<8xf32>
    %24 = vector.shape_cast %23 : vector<8xf32> to vector<8x1xf32>
    %25 = vector.broadcast %24 : vector<8x1xf32> to vector<8x8xf32>
    %26 = arith.subf %22, %25 : vector<8x8xf32>
    %27 = math.exp %26 : vector<8x8xf32>
    %cst_14 = arith.constant dense<0.000000e+00> : vector<8xf32>
    %28 = vector.multi_reduction <add>, %27, %cst_14 [1] : vector<8x8xf32> to vector<8xf32>
    %29 = vector.shape_cast %28 : vector<8xf32> to vector<8x1xf32>
    %30 = tpu.reciprocal %29 {approx = true} : vector<8x1xf32> -> vector<8x1xf32>
    %31 = vector.broadcast %30 : vector<8x1xf32> to vector<8x8xf32>
    %32 = arith.mulf %27, %31 : vector<8x8xf32>
    %33 = arith.truncf %32 : vector<8x8xf32> to vector<8x8xbf16>
    %cst_15 = arith.constant dense<0.000000e+00> : vector<8x4xf32>
    %34 = tpu.matmul %33, %20, %cst_15 {dimension_numbers = #tpu.dot_dimension_numbers<[1], [0], [0], [1], [0, 0, 1, 1], [], []>} : vector<8x8xbf16>, vector<8x4xbf16>, vector<8x4xf32> -> vector<8x4xf32>
    %35 = arith.truncf %34 : vector<8x4xf32> to vector<8x4xbf16>
    %c0_16 = arith.constant 0 : index
    %c0_17 = arith.constant 0 : index
    %36 = vector.load %arg9[%c0_16, %c0_17] : memref<8x32xbf16, #tpu.memory_space<vmem>>, vector<8x4xbf16>
    tpu.vector_store %arg9[%c0_16, %c0_17], %35 {strides = array<i32>} : memref<8x32xbf16, #tpu.memory_space<vmem>>, vector<8x4xbf16>,
    %37 = vector.extract_strided_slice %12 {offsets = [0, 4], sizes = [8, 4], strides = [1, 1]} : vector<8x32xbf16> to vector<8x4xbf16>
    %c0_18 = arith.constant 0 : index
    %c4 = arith.constant 4 : index
    %38 = vector.load %arg8[%c0_18, %c4] : memref<8x64xbf16, #tpu.memory_space<vmem>>, vector<8x4xbf16>
    %c0_19 = arith.constant 0 : index
    %c36 = arith.constant 36 : index
    %39 = vector.load %arg8[%c0_19, %c36] : memref<8x64xbf16, #tpu.memory_space<vmem>>, vector<8x4xbf16>
    %cst_20 = arith.constant dense<0.000000e+00> : vector<8x8xf32>
    %40 = tpu.matmul %37, %38, %cst_20 {dimension_numbers = #tpu.dot_dimension_numbers<[1], [1], [0], [0], [0, 0, 1, 0], [], []>} : vector<8x4xbf16>, vector<8x4xbf16>, vector<8x8xf32> -> vector<8x8xf32>
    %41 = arith.addf %40, %17 : vector<8x8xf32>
    %cst_21 = arith.constant dense<0xFF800000> : vector<8xf32>
    %42 = vector.multi_reduction <maximumf>, %41, %cst_21 [1] : vector<8x8xf32> to vector<8xf32>
    %43 = vector.shape_cast %42 : vector<8xf32> to vector<8x1xf32>
    %44 = vector.broadcast %43 : vector<8x1xf32> to vector<8x8xf32>
    %45 = arith.subf %41, %44 : vector<8x8xf32>
    %46 = math.exp %45 : vector<8x8xf32>
    %cst_22 = arith.constant dense<0.000000e+00> : vector<8xf32>
    %47 = vector.multi_reduction <add>, %46, %cst_22 [1] : vector<8x8xf32> to vector<8xf32>
    %48 = vector.shape_cast %47 : vector<8xf32> to vector<8x1xf32>
    %49 = tpu.reciprocal %48 {approx = true} : vector<8x1xf32> -> vector<8x1xf32>
    %50 = vector.broadcast %49 : vector<8x1xf32> to vector<8x8xf32>
    %51 = arith.mulf %46, %50 : vector<8x8xf32>
    %52 = arith.truncf %51 : vector<8x8xf32> to vector<8x8xbf16>
    %cst_23 = arith.constant dense<0.000000e+00> : vector<8x4xf32>
    %53 = tpu.matmul %52, %39, %cst_23 {dimension_numbers = #tpu.dot_dimension_numbers<[1], [0], [0], [1], [0, 0, 1, 1], [], []>} : vector<8x8xbf16>, vector<8x4xbf16>, vector<8x4xf32> -> vector<8x4xf32>
    %54 = arith.truncf %53 : vector<8x4xf32> to vector<8x4xbf16>
    %c0_24 = arith.constant 0 : index
    %c4_25 = arith.constant 4 : index
    %55 = vector.load %arg9[%c0_24, %c4_25] : memref<8x32xbf16, #tpu.memory_space<vmem>>, vector<8x4xbf16>
    tpu.vector_store %arg9[%c0_24, %c4_25], %54 {strides = array<i32>} : memref<8x32xbf16, #tpu.memory_space<vmem>>, vector<8x4xbf16>,
    %56 = vector.extract_strided_slice %12 {offsets = [0, 8], sizes = [8, 4], strides = [1, 1]} : vector<8x32xbf16> to vector<8x4xbf16>
    %c0_26 = arith.constant 0 : index
    %c8 = arith.constant 8 : index
    %57 = vector.load %arg8[%c0_26, %c8] : memref<8x64xbf16, #tpu.memory_space<vmem>>, vector<8x4xbf16>
    %c0_27 = arith.constant 0 : index
    %c40 = arith.constant 40 : index
    %58 = vector.load %arg8[%c0_27, %c40] : memref<8x64xbf16, #tpu.memory_space<vmem>>, vector<8x4xbf16>
    %cst_28 = arith.constant dense<0.000000e+00> : vector<8x8xf32>
    %59 = tpu.matmul %56, %57, %cst_28 {dimension_numbers = #tpu.dot_dimension_numbers<[1], [1], [0], [0], [0, 0, 1, 0], [], []>} : vector<8x4xbf16>, vector<8x4xbf16>, vector<8x8xf32> -> vector<8x8xf32>
    %60 = arith.addf %59, %17 : vector<8x8xf32>
    %cst_29 = arith.constant dense<0xFF800000> : vector<8xf32>
    %61 = vector.multi_reduction <maximumf>, %60, %cst_29 [1] : vector<8x8xf32> to vector<8xf32>
    %62 = vector.shape_cast %61 : vector<8xf32> to vector<8x1xf32>
    %63 = vector.broadcast %62 : vector<8x1xf32> to vector<8x8xf32>
    %64 = arith.subf %60, %63 : vector<8x8xf32>
    %65 = math.exp %64 : vector<8x8xf32>
    %cst_30 = arith.constant dense<0.000000e+00> : vector<8xf32>
    %66 = vector.multi_reduction <add>, %65, %cst_30 [1] : vector<8x8xf32> to vector<8xf32>
    %67 = vector.shape_cast %66 : vector<8xf32> to vector<8x1xf32>
    %68 = tpu.reciprocal %67 {approx = true} : vector<8x1xf32> -> vector<8x1xf32>
    %69 = vector.broadcast %68 : vector<8x1xf32> to vector<8x8xf32>
    %70 = arith.mulf %65, %69 : vector<8x8xf32>
    %71 = arith.truncf %70 : vector<8x8xf32> to vector<8x8xbf16>
    %cst_31 = arith.constant dense<0.000000e+00> : vector<8x4xf32>
    %72 = tpu.matmul %71, %58, %cst_31 {dimension_numbers = #tpu.dot_dimension_numbers<[1], [0], [0], [1], [0, 0, 1, 1], [], []>} : vector<8x8xbf16>, vector<8x4xbf16>, vector<8x4xf32> -> vector<8x4xf32>
    %73 = arith.truncf %72 : vector<8x4xf32> to vector<8x4xbf16>
    %c0_32 = arith.constant 0 : index
    %c8_33 = arith.constant 8 : index
    %74 = vector.load %arg9[%c0_32, %c8_33] : memref<8x32xbf16, #tpu.memory_space<vmem>>, vector<8x4xbf16>
    tpu.vector_store %arg9[%c0_32, %c8_33], %73 {strides = array<i32>} : memref<8x32xbf16, #tpu.memory_space<vmem>>, vector<8x4xbf16>,
    %75 = vector.extract_strided_slice %12 {offsets = [0, 12], sizes = [8, 4], strides = [1, 1]} : vector<8x32xbf16> to vector<8x4xbf16>
    %c0_34 = arith.constant 0 : index
    %c12 = arith.constant 12 : index
    %76 = vector.load %arg8[%c0_34, %c12] : memref<8x64xbf16, #tpu.memory_space<vmem>>, vector<8x4xbf16>
    %c0_35 = arith.constant 0 : index
    %c44 = arith.constant 44 : index
    %77 = vector.load %arg8[%c0_35, %c44] : memref<8x64xbf16, #tpu.memory_space<vmem>>, vector<8x4xbf16>
    %cst_36 = arith.constant dense<0.000000e+00> : vector<8x8xf32>
    %78 = tpu.matmul %75, %76, %cst_36 {dimension_numbers = #tpu.dot_dimension_numbers<[1], [1], [0], [0], [0, 0, 1, 0], [], []>} : vector<8x4xbf16>, vector<8x4xbf16>, vector<8x8xf32> -> vector<8x8xf32>
    %79 = arith.addf %78, %17 : vector<8x8xf32>
    %cst_37 = arith.constant dense<0xFF800000> : vector<8xf32>
    %80 = vector.multi_reduction <maximumf>, %79, %cst_37 [1] : vector<8x8xf32> to vector<8xf32>
    %81 = vector.shape_cast %80 : vector<8xf32> to vector<8x1xf32>
    %82 = vector.broadcast %81 : vector<8x1xf32> to vector<8x8xf32>
    %83 = arith.subf %79, %82 : vector<8x8xf32>
    %84 = math.exp %83 : vector<8x8xf32>
    %cst_38 = arith.constant dense<0.000000e+00> : vector<8xf32>
    %85 = vector.multi_reduction <add>, %84, %cst_38 [1] : vector<8x8xf32> to vector<8xf32>
    %86 = vector.shape_cast %85 : vector<8xf32> to vector<8x1xf32>
    %87 = tpu.reciprocal %86 {approx = true} : vector<8x1xf32> -> vector<8x1xf32>
    %88 = vector.broadcast %87 : vector<8x1xf32> to vector<8x8xf32>
    %89 = arith.mulf %84, %88 : vector<8x8xf32>
    %90 = arith.truncf %89 : vector<8x8xf32> to vector<8x8xbf16>
    %cst_39 = arith.constant dense<0.000000e+00> : vector<8x4xf32>
    %91 = tpu.matmul %90, %77, %cst_39 {dimension_numbers = #tpu.dot_dimension_numbers<[1], [0], [0], [1], [0, 0, 1, 1], [], []>} : vector<8x8xbf16>, vector<8x4xbf16>, vector<8x4xf32> -> vector<8x4xf32>
    %92 = arith.truncf %91 : vector<8x4xf32> to vector<8x4xbf16>
    %c0_40 = arith.constant 0 : index
    %c12_41 = arith.constant 12 : index
    %93 = vector.load %arg9[%c0_40, %c12_41] : memref<8x32xbf16, #tpu.memory_space<vmem>>, vector<8x4xbf16>
    tpu.vector_store %arg9[%c0_40, %c12_41], %92 {strides = array<i32>} : memref<8x32xbf16, #tpu.memory_space<vmem>>, vector<8x4xbf16>,
    %94 = vector.extract_strided_slice %12 {offsets = [0, 16], sizes = [8, 4], strides = [1, 1]} : vector<8x32xbf16> to vector<8x4xbf16>
    %c0_42 = arith.constant 0 : index
    %c16 = arith.constant 16 : index
    %95 = vector.load %arg8[%c0_42, %c16] : memref<8x64xbf16, #tpu.memory_space<vmem>>, vector<8x4xbf16>
    %c0_43 = arith.constant 0 : index
    %c48 = arith.constant 48 : index
    %96 = vector.load %arg8[%c0_43, %c48] : memref<8x64xbf16, #tpu.memory_space<vmem>>, vector<8x4xbf16>
    %cst_44 = arith.constant dense<0.000000e+00> : vector<8x8xf32>
    %97 = tpu.matmul %94, %95, %cst_44 {dimension_numbers = #tpu.dot_dimension_numbers<[1], [1], [0], [0], [0, 0, 1, 0], [], []>} : vector<8x4xbf16>, vector<8x4xbf16>, vector<8x8xf32> -> vector<8x8xf32>
    %98 = arith.addf %97, %17 : vector<8x8xf32>
    %cst_45 = arith.constant dense<0xFF800000> : vector<8xf32>
    %99 = vector.multi_reduction <maximumf>, %98, %cst_45 [1] : vector<8x8xf32> to vector<8xf32>
    %100 = vector.shape_cast %99 : vector<8xf32> to vector<8x1xf32>
    %101 = vector.broadcast %100 : vector<8x1xf32> to vector<8x8xf32>
    %102 = arith.subf %98, %101 : vector<8x8xf32>
    %103 = math.exp %102 : vector<8x8xf32>
    %cst_46 = arith.constant dense<0.000000e+00> : vector<8xf32>
    %104 = vector.multi_reduction <add>, %103, %cst_46 [1] : vector<8x8xf32> to vector<8xf32>
    %105 = vector.shape_cast %104 : vector<8xf32> to vector<8x1xf32>
    %106 = tpu.reciprocal %105 {approx = true} : vector<8x1xf32> -> vector<8x1xf32>
    %107 = vector.broadcast %106 : vector<8x1xf32> to vector<8x8xf32>
    %108 = arith.mulf %103, %107 : vector<8x8xf32>
    %109 = arith.truncf %108 : vector<8x8xf32> to vector<8x8xbf16>
    %cst_47 = arith.constant dense<0.000000e+00> : vector<8x4xf32>
    %110 = tpu.matmul %109, %96, %cst_47 {dimension_numbers = #tpu.dot_dimension_numbers<[1], [0], [0], [1], [0, 0, 1, 1], [], []>} : vector<8x8xbf16>, vector<8x4xbf16>, vector<8x4xf32> -> vector<8x4xf32>
    %111 = arith.truncf %110 : vector<8x4xf32> to vector<8x4xbf16>
    %c0_48 = arith.constant 0 : index
    %c16_49 = arith.constant 16 : index
    %112 = vector.load %arg9[%c0_48, %c16_49] : memref<8x32xbf16, #tpu.memory_space<vmem>>, vector<8x4xbf16>
    tpu.vector_store %arg9[%c0_48, %c16_49], %111 {strides = array<i32>} : memref<8x32xbf16, #tpu.memory_space<vmem>>, vector<8x4xbf16>,
    %113 = vector.extract_strided_slice %12 {offsets = [0, 20], sizes = [8, 4], strides = [1, 1]} : vector<8x32xbf16> to vector<8x4xbf16>
    %c0_50 = arith.constant 0 : index
    %c20 = arith.constant 20 : index
    %114 = vector.load %arg8[%c0_50, %c20] : memref<8x64xbf16, #tpu.memory_space<vmem>>, vector<8x4xbf16>
    %c0_51 = arith.constant 0 : index
    %c52 = arith.constant 52 : index
    %115 = vector.load %arg8[%c0_51, %c52] : memref<8x64xbf16, #tpu.memory_space<vmem>>, vector<8x4xbf16>
    %cst_52 = arith.constant dense<0.000000e+00> : vector<8x8xf32>
    %116 = tpu.matmul %113, %114, %cst_52 {dimension_numbers = #tpu.dot_dimension_numbers<[1], [1], [0], [0], [0, 0, 1, 0], [], []>} : vector<8x4xbf16>, vector<8x4xbf16>, vector<8x8xf32> -> vector<8x8xf32>
    %117 = arith.addf %116, %17 : vector<8x8xf32>
    %cst_53 = arith.constant dense<0xFF800000> : vector<8xf32>
    %118 = vector.multi_reduction <maximumf>, %117, %cst_53 [1] : vector<8x8xf32> to vector<8xf32>
    %119 = vector.shape_cast %118 : vector<8xf32> to vector<8x1xf32>
    %120 = vector.broadcast %119 : vector<8x1xf32> to vector<8x8xf32>
    %121 = arith.subf %117, %120 : vector<8x8xf32>
    %122 = math.exp %121 : vector<8x8xf32>
    %cst_54 = arith.constant dense<0.000000e+00> : vector<8xf32>
    %123 = vector.multi_reduction <add>, %122, %cst_54 [1] : vector<8x8xf32> to vector<8xf32>
    %124 = vector.shape_cast %123 : vector<8xf32> to vector<8x1xf32>
    %125 = tpu.reciprocal %124 {approx = true} : vector<8x1xf32> -> vector<8x1xf32>
    %126 = vector.broadcast %125 : vector<8x1xf32> to vector<8x8xf32>
    %127 = arith.mulf %122, %126 : vector<8x8xf32>
    %128 = arith.truncf %127 : vector<8x8xf32> to vector<8x8xbf16>
    %cst_55 = arith.constant dense<0.000000e+00> : vector<8x4xf32>
    %129 = tpu.matmul %128, %115, %cst_55 {dimension_numbers = #tpu.dot_dimension_numbers<[1], [0], [0], [1], [0, 0, 1, 1], [], []>} : vector<8x8xbf16>, vector<8x4xbf16>, vector<8x4xf32> -> vector<8x4xf32>
    %130 = arith.truncf %129 : vector<8x4xf32> to vector<8x4xbf16>
    %c0_56 = arith.constant 0 : index
    %c20_57 = arith.constant 20 : index
    %131 = vector.load %arg9[%c0_56, %c20_57] : memref<8x32xbf16, #tpu.memory_space<vmem>>, vector<8x4xbf16>
    tpu.vector_store %arg9[%c0_56, %c20_57], %130 {strides = array<i32>} : memref<8x32xbf16, #tpu.memory_space<vmem>>, vector<8x4xbf16>,
    %132 = vector.extract_strided_slice %12 {offsets = [0, 24], sizes = [8, 4], strides = [1, 1]} : vector<8x32xbf16> to vector<8x4xbf16>
    %c0_58 = arith.constant 0 : index
    %c24 = arith.constant 24 : index
    %133 = vector.load %arg8[%c0_58, %c24] : memref<8x64xbf16, #tpu.memory_space<vmem>>, vector<8x4xbf16>
    %c0_59 = arith.constant 0 : index
    %c56 = arith.constant 56 : index
    %134 = vector.load %arg8[%c0_59, %c56] : memref<8x64xbf16, #tpu.memory_space<vmem>>, vector<8x4xbf16>
    %cst_60 = arith.constant dense<0.000000e+00> : vector<8x8xf32>
    %135 = tpu.matmul %132, %133, %cst_60 {dimension_numbers = #tpu.dot_dimension_numbers<[1], [1], [0], [0], [0, 0, 1, 0], [], []>} : vector<8x4xbf16>, vector<8x4xbf16>, vector<8x8xf32> -> vector<8x8xf32>
    %136 = arith.addf %135, %17 : vector<8x8xf32>
    %cst_61 = arith.constant dense<0xFF800000> : vector<8xf32>
    %137 = vector.multi_reduction <maximumf>, %136, %cst_61 [1] : vector<8x8xf32> to vector<8xf32>
    %138 = vector.shape_cast %137 : vector<8xf32> to vector<8x1xf32>
    %139 = vector.broadcast %138 : vector<8x1xf32> to vector<8x8xf32>
    %140 = arith.subf %136, %139 : vector<8x8xf32>
    %141 = math.exp %140 : vector<8x8xf32>
    %cst_62 = arith.constant dense<0.000000e+00> : vector<8xf32>
    %142 = vector.multi_reduction <add>, %141, %cst_62 [1] : vector<8x8xf32> to vector<8xf32>
    %143 = vector.shape_cast %142 : vector<8xf32> to vector<8x1xf32>
    %144 = tpu.reciprocal %143 {approx = true} : vector<8x1xf32> -> vector<8x1xf32>
    %145 = vector.broadcast %144 : vector<8x1xf32> to vector<8x8xf32>
    %146 = arith.mulf %141, %145 : vector<8x8xf32>
    %147 = arith.truncf %146 : vector<8x8xf32> to vector<8x8xbf16>
    %cst_63 = arith.constant dense<0.000000e+00> : vector<8x4xf32>
    %148 = tpu.matmul %147, %134, %cst_63 {dimension_numbers = #tpu.dot_dimension_numbers<[1], [0], [0], [1], [0, 0, 1, 1], [], []>} : vector<8x8xbf16>, vector<8x4xbf16>, vector<8x4xf32> -> vector<8x4xf32>
    %149 = arith.truncf %148 : vector<8x4xf32> to vector<8x4xbf16>
    %c0_64 = arith.constant 0 : index
    %c24_65 = arith.constant 24 : index
    %150 = vector.load %arg9[%c0_64, %c24_65] : memref<8x32xbf16, #tpu.memory_space<vmem>>, vector<8x4xbf16>
    tpu.vector_store %arg9[%c0_64, %c24_65], %149 {strides = array<i32>} : memref<8x32xbf16, #tpu.memory_space<vmem>>, vector<8x4xbf16>,
    %151 = vector.extract_strided_slice %12 {offsets = [0, 28], sizes = [8, 4], strides = [1, 1]} : vector<8x32xbf16> to vector<8x4xbf16>
    %c0_66 = arith.constant 0 : index
    %c28 = arith.constant 28 : index
    %152 = vector.load %arg8[%c0_66, %c28] : memref<8x64xbf16, #tpu.memory_space<vmem>>, vector<8x4xbf16>
    %c0_67 = arith.constant 0 : index
    %c60 = arith.constant 60 : index
    %153 = vector.load %arg8[%c0_67, %c60] : memref<8x64xbf16, #tpu.memory_space<vmem>>, vector<8x4xbf16>
    %cst_68 = arith.constant dense<0.000000e+00> : vector<8x8xf32>
    %154 = tpu.matmul %151, %152, %cst_68 {dimension_numbers = #tpu.dot_dimension_numbers<[1], [1], [0], [0], [0, 0, 1, 0], [], []>} : vector<8x4xbf16>, vector<8x4xbf16>, vector<8x8xf32> -> vector<8x8xf32>
    %155 = arith.addf %154, %17 : vector<8x8xf32>
    %cst_69 = arith.constant dense<0xFF800000> : vector<8xf32>
    %156 = vector.multi_reduction <maximumf>, %155, %cst_69 [1] : vector<8x8xf32> to vector<8xf32>
    %157 = vector.shape_cast %156 : vector<8xf32> to vector<8x1xf32>
    %158 = vector.broadcast %157 : vector<8x1xf32> to vector<8x8xf32>
    %159 = arith.subf %155, %158 : vector<8x8xf32>
    %160 = math.exp %159 : vector<8x8xf32>
    %cst_70 = arith.constant dense<0.000000e+00> : vector<8xf32>
    %161 = vector.multi_reduction <add>, %160, %cst_70 [1] : vector<8x8xf32> to vector<8xf32>
    %162 = vector.shape_cast %161 : vector<8xf32> to vector<8x1xf32>
    %163 = tpu.reciprocal %162 {approx = true} : vector<8x1xf32> -> vector<8x1xf32>
    %164 = vector.broadcast %163 : vector<8x1xf32> to vector<8x8xf32>
    %165 = arith.mulf %160, %164 : vector<8x8xf32>
    %166 = arith.truncf %165 : vector<8x8xf32> to vector<8x8xbf16>
    %cst_71 = arith.constant dense<0.000000e+00> : vector<8x4xf32>
    %167 = tpu.matmul %166, %153, %cst_71 {dimension_numbers = #tpu.dot_dimension_numbers<[1], [0], [0], [1], [0, 0, 1, 1], [], []>} : vector<8x8xbf16>, vector<8x4xbf16>, vector<8x4xf32> -> vector<8x4xf32>
    %168 = arith.truncf %167 : vector<8x4xf32> to vector<8x4xbf16>
    %c0_72 = arith.constant 0 : index
    %c28_73 = arith.constant 28 : index
    %169 = vector.load %arg9[%c0_72, %c28_73] : memref<8x32xbf16, #tpu.memory_space<vmem>>, vector<8x4xbf16>
    tpu.vector_store %arg9[%c0_72, %c28_73], %168 {strides = array<i32>} : memref<8x32xbf16, #tpu.memory_space<vmem>>, vector<8x4xbf16>,
    %c0_74 = arith.constant 0 : index
    %c0_75 = arith.constant 0 : index
    %170 = vector.load %arg9[%c0_74, %c0_75] : memref<8x32xbf16, #tpu.memory_space<vmem>>, vector<8x32xbf16>
    %c0_76 = arith.constant 0 : index
    %c0_77 = arith.constant 0 : index
    %171 = vector.load %arg4[%c0_76, %c0_77] : memref<32x32xbf16, #tpu.memory_space<vmem>>, vector<32x32xbf16>
    %cst_78 = arith.constant dense<0.000000e+00> : vector<8x32xf32>
    %172 = tpu.matmul %170, %171, %cst_78 {dimension_numbers = #tpu.dot_dimension_numbers<[1], [0], [0], [1], [0, 0, 1, 1], [], []>} : vector<8x32xbf16>, vector<32x32xbf16>, vector<8x32xf32> -> vector<8x32xf32>
    %c0_79 = arith.constant 0 : index
    %c0_80 = arith.constant 0 : index
    %173 = vector.load %arg5[%c0_79, %c0_80] : memref<1x32xf32, #tpu.memory_space<vmem>>, vector<1x32xf32>
    %174 = vector.broadcast %173 : vector<1x32xf32> to vector<8x32xf32>
    %175 = arith.addf %172, %174 : vector<8x32xf32>
    %176 = vector.shape_cast %175 : vector<8x32xf32> to vector<1x8x32xf32>
    %c0_81 = arith.constant 0 : index
    %c0_82 = arith.constant 0 : index
    %c0_83 = arith.constant 0 : index
    %177 = vector.load %arg7[%c0_81, %c0_82, %c0_83] : memref<1x8x32xf32, #tpu.memory_space<vmem>>, vector<1x8x32xf32>
    tpu.vector_store %arg7[%c0_81, %c0_82, %c0_83], %176 {strides = array<i32>} : memref<1x8x32xf32, #tpu.memory_space<vmem>>, vector<1x8x32xf32>,
    return
  }
  func.func @transform_0(%arg0: i32, %arg1: i32) -> (i32, i32, i32) {
    %c0_i32 = arith.constant 0 : i32
    %c0_i32_0 = arith.constant 0 : i32
    %c0_i32_1 = arith.constant 0 : i32
    return %arg0, %c0_i32, %c0_i32_0 : i32, i32, i32
  }
  func.func @transform_1(%arg0: i32, %arg1: i32) -> (i32, i32) {
    %c0_i32 = arith.constant 0 : i32
    %c0_i32_0 = arith.constant 0 : i32
    %c0_i32_1 = arith.constant 0 : i32
    return %c0_i32, %c0_i32_0 : i32, i32
  }
  func.func @transform_2(%arg0: i32, %arg1: i32) -> (i32, i32) {
    %c0_i32 = arith.constant 0 : i32
    %c0_i32_0 = arith.constant 0 : i32
    %c0_i32_1 = arith.constant 0 : i32
    return %c0_i32, %c0_i32_0 : i32, i32
  }
  func.func @transform_3(%arg0: i32, %arg1: i32) -> (i32, i32) {
    %c0_i32 = arith.constant 0 : i32
    %c0_i32_0 = arith.constant 0 : i32
    %c0_i32_1 = arith.constant 0 : i32
    return %c0_i32, %c0_i32_0 : i32, i32
  }
  func.func @transform_4(%arg0: i32, %arg1: i32) -> (i32, i32, i32) {
    %c0_i32 = arith.constant 0 : i32
    %c0_i32_0 = arith.constant 0 : i32
    return %arg0, %arg1, %c0_i32 : i32, i32, i32
  }
  func.func @transform_5(%arg0: i32, %arg1: i32) -> (i32, i32, i32) {
    %c0_i32 = arith.constant 0 : i32
    %c0_i32_0 = arith.constant 0 : i32
    return %arg0, %arg1, %c0_i32 : i32, i32, i32
  }
}

</mosaic_0001>

<llo_original>
// kernel: tpu_custom_call.1
$region0: #{tpu_custom_call.1}
  #allocation0 [shape = 'u32[]', space=smem, size = 0x4, offset = 0x4, fixed_abs, tag = 'smem constant byte address 0x4 - core index']
  #allocation1 [shape = 'u32[144,128]{1,0:T(1,128)}', space=vmem, size = 0x12000, scoped, tag = 'internal scratch']
  #allocation2 [shape = 'bf16[8,64]{1,0:T(8,128)(2,1)}', space=vmem, size = 0x800, scoped, tag = 'scratch operand']
  #allocation3 [shape = 'bf16[8,32]{1,0:T(8,128)(2,1)}', space=vmem, size = 0x800, scoped, tag = 'scratch operand']
  %s0 = inlined_call_operand.hbm [shape: bf16[2,8,32], index: 0, kind: input, shape index: {}]
  %s1 = inlined_call_operand.hbm [shape: bf16[32,96], index: 1, kind: input, shape index: {}]
  %s2 = inlined_call_operand.hbm [shape: bf16[32,32], index: 2, kind: input, shape index: {}]
  %s3 = inlined_call_operand.vmem [shape: f32[1,32], index: 3, kind: input, shape index: {}]
  %s4 = inlined_call_operand.vmem [shape: bf16[2,8,8], index: 4, kind: input, shape index: {}]
  %s5 = inlined_call_operand.hbm [shape: f32[2,8,32], index: 5, kind: output, shape index: {}]
  %s6 = sld [smem:[#allocation0]]
  $region69: #{tpu_custom_call.1} parent=0
    _
  %s8 = ssub.s32 1, %s6
  %s9 = scalar_select 0, %s8, %s6
  $region1: #{tpu_custom_call.1} parent=0
    #allocation4 [shape = 'u8[4096]{0}', space=vmem, size = 0x1000, scoped, tag = 'input window, operand 0']
    #allocation5 [shape = 's32[2]{0}', space=sflag, size = 0x8, scoped, tag = 'scoped memory for tpu_custom_call.1']
    #allocation6 [shape = 's32[2]{0}', space=sflag, size = 0x8, scoped, tag = 'scoped memory for tpu_custom_call.1']
    #allocation7 [shape = 'u8[8192]{0}', space=vmem, size = 0x2000, scoped, tag = 'input window, operand 1, single buffered']
    #allocation8 [shape = 's32[1]{0}', space=sflag, size = 0x4, scoped, tag = 'scoped memory for tpu_custom_call.1']
    #allocation9 [shape = 'u8[8192]{0}', space=vmem, size = 0x2000, scoped, tag = 'input window, operand 2, single buffered']
    #allocation10 [shape = 'u8[8192]{0}', space=vmem, size = 0x2000, scoped, tag = 'output window, operand 0']
    %10 = vsyncpa [#allocation5], 0
    %s11 = scalar_lea.sflag [#allocation5], 1
    %12 = vsyncpa %s11, 0
    %13 = vsyncpa [#allocation8], 0
    %14 = vsyncpa [#allocation6], 0
    %s15 = scalar_lea.sflag [#allocation6], 1
    %16 = vsyncpa %s15, 0
    loop: start=0, step=1, limit=4
    $region2: #{tpu_custom_call.1} parent=1 // loop_pre_header
      _
    $region3: #{tpu_custom_call.1} parent=1 // loop_header
      %s18 = sphi 0, %s22
      %p19 = scmp.ge.s32.totalorder %s18, 4
      %s25 = sphi 0, %s37
      %s26 = sphi 0, %s33
      %s27 = sphi 0, %s25
      %s28 = sphi 0, %s26
      %s29 = sphi 0, %s27
      %s30 = sphi 0, %s28
      %s40 = sphi 0, %s42
      %s43 = sphi 0, %s40
      %s44 = sphi 0, %s43
      %s60 = sphi 0, %s44
      %s64 = sphi 0, %s64
      %s66 = sphi 0, %s64
      %s67 = sphi 0, %s66
      %s81 = sphi 0, %s67
      %s85 = sphi 0, %s85
      %s87 = sphi 0, %s85
      %s88 = sphi 0, %s87
      %s102 = sphi 0, %s88
      %s106 = sphi 0, %s106
      %s108 = sphi 0, %s106
      %s109 = sphi 0, %s108
      %s123 = sphi 0, %s109
      %s131 = sphi 0, %s133
      %s134 = sphi 0, %s131
      %s135 = sphi 0, %s134
      %s151 = sphi 0, %s135
      %s159 = sphi 0, %s161
      %s162 = sphi 0, %s159
      %s163 = sphi 0, %s162
      %s179 = sphi 0, %s163
    $region4: #{tpu_custom_call.1} parent=1 // loop_header_branch
      %21 = sbr.rel (%p19) target = $region8
    $region5: #{tpu_custom_call.1} parent=1 // loop_body
      %s23 = ssub.s32 %s18, 1
      %s24 = ssub.s32 %s18, 2
      %s31 = sadd.s32 1, %s26
      %p32 = scmp.ge.s32.totalorder %s31, 1
      %s33 = scalar_select %p32, 0, %s31
      %s34 = sadd.s32 1, %s25
      %s35 = scalar_select %p32, %s34, %s25
      %p36 = scmp.ge.s32.totalorder %s35, 2
      %s37 = scalar_select %p36, 0, %s35
      %s38 = ssub.s32 %s25, %s37
      %p39 = scmp.eq.s32.totalorder %s38, 0
      %s41 = sadd.s32 %s40, 1
      %s42 = scalar_select %p39, %s40, %s41
      %p45 = pneg %p39
      %p46 = scmp.eq.s32.totalorder %s18, 1
      %p47 = por %p45, %p46
      %p48 = scmp.ne.s32.totalorder %s40, %s43
      %p49 = scmp.eq.s32.totalorder %s18, 0
      %p50 = por %p48, %p49
      %p51 = scmp.ne.s32.totalorder %s40, %s43
      %p52 = scmp.eq.s32.totalorder %s23, 1
      %p53 = por %p51, %p52
      %p54 = scmp.ne.s32.totalorder %s43, %s44
      %p55 = scmp.eq.s32.totalorder %s23, 0
      %p56 = por %p54, %p55
      %p57 = scmp.ne.s32.totalorder %s43, %s44
      %p58 = scmp.eq.s32.totalorder %s24, 1
      %p59 = por %p57, %p58
      %p61 = scmp.ne.s32.totalorder %s44, %s60
      %p62 = scmp.eq.s32.totalorder %s24, 0
      %p63 = por %p61, %p62
      %s65 = sadd.s32 %s64, 1
      %p68 = scmp.eq.s32.totalorder %s18, 1
      %p69 = scmp.ne.s32.totalorder %s64, %s66
      %p70 = scmp.eq.s32.totalorder %s18, 0
      %p71 = por %p69, %p70
      %p72 = scmp.ne.s32.totalorder %s64, %s66
      %p73 = scmp.eq.s32.totalorder %s23, 1
      %p74 = por %p72, %p73
      %p75 = scmp.ne.s32.totalorder %s66, %s67
      %p76 = scmp.eq.s32.totalorder %s23, 0
      %p77 = por %p75, %p76
      %p78 = scmp.ne.s32.totalorder %s66, %s67
      %p79 = scmp.eq.s32.totalorder %s24, 1
      %p80 = por %p78, %p79
      %p82 = scmp.ne.s32.totalorder %s67, %s81
      %p83 = scmp.eq.s32.totalorder %s24, 0
      %p84 = por %p82, %p83
      %s86 = sadd.s32 %s85, 1
      %p89 = scmp.eq.s32.totalorder %s18, 1
      %p90 = scmp.ne.s32.totalorder %s85, %s87
      %p91 = scmp.eq.s32.totalorder %s18, 0
      %p92 = por %p90, %p91
      %p93 = scmp.ne.s32.totalorder %s85, %s87
      %p94 = scmp.eq.s32.totalorder %s23, 1
      %p95 = por %p93, %p94
      %p96 = scmp.ne.s32.totalorder %s87, %s88
      %p97 = scmp.eq.s32.totalorder %s23, 0
      %p98 = por %p96, %p97
      %p99 = scmp.ne.s32.totalorder %s87, %s88
      %p100 = scmp.eq.s32.totalorder %s24, 1
      %p101 = por %p99, %p100
      %p103 = scmp.ne.s32.totalorder %s88, %s102
      %p104 = scmp.eq.s32.totalorder %s24, 0
      %p105 = por %p103, %p104
      %s107 = sadd.s32 %s106, 1
      %p110 = scmp.eq.s32.totalorder %s18, 1
      %p111 = scmp.ne.s32.totalorder %s106, %s108
      %p112 = scmp.eq.s32.totalorder %s18, 0
      %p113 = por %p111, %p112
      %p114 = scmp.ne.s32.totalorder %s106, %s108
      %p115 = scmp.eq.s32.totalorder %s23, 1
      %p116 = por %p114, %p115
      %p117 = scmp.ne.s32.totalorder %s108, %s109
      %p118 = scmp.eq.s32.totalorder %s23, 0
      %p119 = por %p117, %p118
      %p120 = scmp.ne.s32.totalorder %s108, %s109
      %p121 = scmp.eq.s32.totalorder %s24, 1
      %p122 = por %p120, %p121
      %p124 = scmp.ne.s32.totalorder %s109, %s123
      %p125 = scmp.eq.s32.totalorder %s24, 0
      %p126 = por %p124, %p125
      %s127 = ssub.s32 %s25, %s37
      %s128 = ssub.s32 %s26, %s33
      %s129 = sor.u32 %s127, %s128
      %p130 = scmp.eq.s32.totalorder %s129, 0
      %s132 = sadd.s32 %s131, 1
      %s133 = scalar_select %p130, %s131, %s132
      %p136 = pneg %p130
      %p137 = scmp.eq.s32.totalorder %s18, 1
      %p138 = por %p136, %p137
      %p139 = scmp.ne.s32.totalorder %s131, %s134
      %p140 = scmp.eq.s32.totalorder %s18, 0
      %p141 = por %p139, %p140
      %p142 = scmp.ne.s32.totalorder %s131, %s134
      %p143 = scmp.eq.s32.totalorder %s23, 1
      %p144 = por %p142, %p143
      %p145 = scmp.ne.s32.totalorder %s134, %s135
      %p146 = scmp.eq.s32.totalorder %s23, 0
      %p147 = por %p145, %p146
      %p148 = scmp.ne.s32.totalorder %s134, %s135
      %p149 = scmp.eq.s32.totalorder %s24, 1
      %p150 = por %p148, %p149
      %p152 = scmp.ne.s32.totalorder %s135, %s151
      %p153 = scmp.eq.s32.totalorder %s24, 0
      %p154 = por %p152, %p153
      %s155 = ssub.s32 %s25, %s37
      %s156 = ssub.s32 %s26, %s33
      %s157 = sor.u32 %s155, %s156
      %p158 = scmp.eq.s32.totalorder %s157, 0
      %s160 = sadd.s32 %s159, 1
      %s161 = scalar_select %p158, %s159, %s160
      %p164 = pneg %p158
      %p165 = scmp.eq.s32.totalorder %s18, 1
      %p166 = por %p164, %p165
      %p167 = scmp.ne.s32.totalorder %s159, %s162
      %p168 = scmp.eq.s32.totalorder %s18, 0
      %p169 = por %p167, %p168
      %p170 = scmp.ne.s32.totalorder %s159, %s162
      %p171 = scmp.eq.s32.totalorder %s23, 1
      %p172 = por %p170, %p171
      %p173 = scmp.ne.s32.totalorder %s162, %s163
      %p174 = scmp.eq.s32.totalorder %s23, 0
      %p175 = por %p173, %p174
      %p176 = scmp.ne.s32.totalorder %s162, %s163
      %p177 = scmp.eq.s32.totalorder %s24, 1
      %p178 = por %p176, %p177
      %p180 = scmp.ne.s32.totalorder %s163, %s179
      %p181 = scmp.eq.s32.totalorder %s24, 0
      %p182 = por %p180, %p181
      %p183 = scmp.le.s32.totalorder 1, %s18
      %p184 = scmp.lt.s32.totalorder %s18, 3
      %p185 = pnand %p183, %p184
      %p186 = pneg %p185
      // Predicated region
      $region9: #{tpu_custom_call.1} parent=5 // pred_check
        _
      $region10: #{tpu_custom_call.1} parent=5 // pred_check_branch
        %188 = sbr.rel (%p185) target = $region12
      $region11: #{tpu_custom_call.1} parent=5 // pred_region
        %s189 = ssub.s32 %s18, 1
        // Predicated region
        $region13: #{tpu_custom_call.1} parent=11 // pred_check
          %p190 = pneg %p77
        $region14: #{tpu_custom_call.1} parent=11 // pred_check_branch
          %192 = sbr.rel (%p190) target = $region16
        $region15: #{tpu_custom_call.1} parent=11 // pred_region
          %s194 = ssub.s32 256, 256
          %195 = vsyncadd [#allocation8], %s194
          %s196 = sshll.u32 [#allocation7], 4
          %s197 = int_to_ptr.vmem [resolvable:$true] %s196
          %202 = dma.hbm_to_vmem [thread:$0]  %s1, 256, %s197, [#allocation8], 64, 64, 4
        $region16: #{tpu_custom_call.1} parent=11 // pred_fallthru
          _
        // Predicated region
        $region17: #{tpu_custom_call.1} parent=11 // pred_check
          %p203 = pneg %p98
        $region18: #{tpu_custom_call.1} parent=11 // pred_check_branch
          %205 = sbr.rel (%p203) target = $region20
        $region19: #{tpu_custom_call.1} parent=11 // pred_region
          %s207 = ssub.s32 256, 256
          %208 = vsyncadd [#allocation8], %s207
          %s209 = sshll.u32 [#allocation9], 4
          %s210 = int_to_ptr.vmem [resolvable:$true] %s209
          %215 = dma.hbm_to_vmem [thread:$0]  %s2, 256, %s210, [#allocation8], 64, 64, 4
        $region20: #{tpu_custom_call.1} parent=11 // pred_fallthru
          _
        // Predicated region
        $region21: #{tpu_custom_call.1} parent=11 // pred_check
          %p216 = pneg %p119
        $region22: #{tpu_custom_call.1} parent=11 // pred_check_branch
          %218 = sbr.rel (%p216) target = $region24
        $region23: #{tpu_custom_call.1} parent=11 // pred_region
          _
        $region24: #{tpu_custom_call.1} parent=11 // pred_fallthru
          _
      $region12: #{tpu_custom_call.1} parent=5 // pred_fallthru
        _
      %p219 = scmp.lt.s32.totalorder %s18, 2
      // Predicated region
      $region25: #{tpu_custom_call.1} parent=5 // pred_check
        %p220 = pneg %p219
      $region26: #{tpu_custom_call.1} parent=5 // pred_check_branch
        %222 = sbr.rel (%p220) target = $region28
      $region27: #{tpu_custom_call.1} parent=5 // pred_region
        // Predicated region
        $region29: #{tpu_custom_call.1} parent=27 // pred_check
          %p223 = pneg %p50
        $region30: #{tpu_custom_call.1} parent=27 // pred_check_branch
          %225 = sbr.rel (%p223) target = $region32
        $region31: #{tpu_custom_call.1} parent=27 // pred_region
          %s226 = sand.u32 %s40, 1
          %s227 = scalar_lea.sflag [#allocation5], %s226
          %s228 = sand.u32 %s40, 1
          %s229 = smul.addr %s228, 4
          %s230 = scalar_lea.vmem [#allocation4], %s229
          %s232 = ssub.s32 64, 64
          %233 = vsyncadd %s227, %s232
          %s234 = smul.addr %s25, 64
          %s235 = scalar_lea.hbm %s0, %s234
          %s237 = sshll.u32 %s230, 4
          %s238 = int_to_ptr.vmem [resolvable:$true] %s237
          %240 = dma.hbm_to_vmem [thread:$0]  %s235, 64, %s238, %s227
        $region32: #{tpu_custom_call.1} parent=27 // pred_fallthru
          _
        // Predicated region
        $region33: #{tpu_custom_call.1} parent=27 // pred_check
          %p241 = pneg %p141
        $region34: #{tpu_custom_call.1} parent=27 // pred_check_branch
          %243 = sbr.rel (%p241) target = $region36
        $region35: #{tpu_custom_call.1} parent=27 // pred_region
          %p244 = scmp.lt.s32.totalorder %s25, 1
          %s245 = scalar_select %p244, %s25, 1
          %p246 = scmp.lt.s32.totalorder %s26, 0
          %s247 = scalar_select %p246, %s26, 0
          %s248 = sadd.s32 %s247, %s245
          %s249 = smul.addr %s248, 4
          %s250 = scalar_lea.vmem %s4, %s249
        $region36: #{tpu_custom_call.1} parent=27 // pred_fallthru
          _
      $region28: #{tpu_custom_call.1} parent=5 // pred_fallthru
        _
      %p251 = scmp.le.s32.totalorder 1, %s18
      %p252 = scmp.lt.s32.totalorder %s18, 3
      %p253 = pnand %p251, %p252
      %p254 = pneg %p253
      // Predicated region
      $region37: #{tpu_custom_call.1} parent=5 // pred_check
        _
      $region38: #{tpu_custom_call.1} parent=5 // pred_check_branch
        %256 = sbr.rel (%p253) target = $region40
      $region39: #{tpu_custom_call.1} parent=5 // pred_region
        %s257 = ssub.s32 %s18, 1
        %s258 = sand.u32 %s43, 1
        %s259 = scalar_lea.sflag [#allocation5], %s258
        %s260 = sand.u32 %s43, 1
        %s261 = smul.addr %s260, 4
        %s262 = scalar_lea.vmem [#allocation4], %s261
        // Predicated region
        $region41: #{tpu_custom_call.1} parent=39 // pred_check
          %p263 = pneg %p56
        $region42: #{tpu_custom_call.1} parent=39 // pred_check_branch
          %265 = sbr.rel (%p263) target = $region44
        $region43: #{tpu_custom_call.1} parent=39 // pred_region
          %266 = dma.done %s259, 64
        $region44: #{tpu_custom_call.1} parent=39 // pred_fallthru
          _
        // Predicated region
        $region45: #{tpu_custom_call.1} parent=39 // pred_check
          %p267 = pneg %p77
        $region46: #{tpu_custom_call.1} parent=39 // pred_check_branch
          %269 = sbr.rel (%p267) target = $region48
        $region47: #{tpu_custom_call.1} parent=39 // pred_region
          %270 = dma.done [#allocation8], 256
        $region48: #{tpu_custom_call.1} parent=39 // pred_fallthru
          _
        // Predicated region
        $region49: #{tpu_custom_call.1} parent=39 // pred_check
          %p271 = pneg %p98
        $region50: #{tpu_custom_call.1} parent=39 // pred_check_branch
          %273 = sbr.rel (%p271) target = $region52
        $region51: #{tpu_custom_call.1} parent=39 // pred_region
          %274 = dma.done [#allocation8], 256
        $region52: #{tpu_custom_call.1} parent=39 // pred_fallthru
          _
        %s275 = sand.u32 %s43, 1
        %s276 = scalar_lea.sflag [#allocation5], %s275
        %s277 = sand.u32 %s43, 1
        %s278 = smul.addr %s277, 4
        %s279 = scalar_lea.vmem [#allocation4], %s278
        %p280 = pneg %p56
        %p281 = pneg %p53
        %p282 = pneg %p77
        %p283 = pneg %p74
        %p284 = pneg %p98
        %p285 = pneg %p95
        %p286 = pneg %p119
        %p287 = pneg %p116
        %p288 = scmp.lt.s32.totalorder %s27, 1
        %s289 = scalar_select %p288, %s27, 1
        %p290 = scmp.lt.s32.totalorder %s28, 0
        %s291 = scalar_select %p290, %s28, 0
        %s292 = sadd.s32 %s291, %s289
        %s293 = smul.addr %s292, 4
        %s294 = scalar_lea.vmem %s4, %s293
        %p295 = pneg %p147
        %p296 = pneg %p144
        %p297 = pneg %p175
        %p298 = pneg %p172
        %s299 = sand.u32 %s162, 1
        %s300 = scalar_lea.sflag [#allocation6], %s299
        %s301 = sand.u32 %s162, 1
        %s302 = smul.addr %s301, 8
        %s303 = scalar_lea.vmem [#allocation10], %s302
        %p304 = scmp.lt.s32.totalorder %s27, 1
        %s305 = scalar_select %p304, %s27, 1
        %p306 = scmp.lt.s32.totalorder %s28, 0
        %s307 = scalar_select %p306, %s28, 0
        %s308 = sadd.s32 %s307, %s305
        %s309 = smul.addr %s308, 4
        %s310 = scalar_lea.vmem %s4, %s309
        %p312 = scmp.eq.s32.totalorder %s28, 0
        // Predicated region
        $region53: #{tpu_custom_call.1} parent=39 // pred_check
          %p313 = pneg %p312
        $region54: #{tpu_custom_call.1} parent=39 // pred_check_branch
          %315 = sbr.rel (%p313) target = $region56
        $region55: #{tpu_custom_call.1} parent=39 // pred_region
          %v316 = vld [vmem:[%s262] sm:$0xf]
          %v317 = vld [vmem:[#allocation7] sm:$0xf]
          %v318 = vld [vmem:[#allocation7 + $0x4] sm:$0xf]
          %v319 = vld [vmem:[#allocation7 + $0x8] sm:$0xf]
          %v320 = vld [vmem:[#allocation7 + $0xc] sm:$0xf]
          %v325 = vunpack.c.l.b16 %v317
          %v326 = vunpack.c.l.b16 %v318
          %v327 = vunpack.c.l.b16 %v319
          %v328 = vunpack.c.l.b16 %v320
          %v329 = vpack.c.b16 %v326, %v325
          %v330 = vpack.c.b16 %v328, %v327
          %331 = vrot.lane.b32.xlu0 %v329, 96
          %v332 = vpop.permute.xlu0 %331
          %333 = vrot.lane.b32.xlu0 %v330, 96
          %v334 = vpop.permute.xlu0 %333
          %vm337 = vcmask 261120
          %v339 = vsel %vm337, %v316, 0
          %341 = vmatprep.subr.bf16.mxu0 0
          %342 = vmatpush1.bf16.msra.mxu0 %v332
          %343 = vmatprep.subr.bf16.mxu0 0
          %344 = vmatpush1.bf16.msra.mxu0 %v334
          %345 = vmatprep.subr.bf16.mxu0 0
          %346 = vmatpush1.bf16.msra.mxu0 0
          %347 = vmatprep.subr.bf16.mxu0 0
          %348 = vmatpush1.bf16.msra.mxu0 0
          %349 = vmatprep.subr.bf16.mxu0 0
          %350 = vmatpush1.bf16.msra.mxu0 0
          %351 = vmatprep.subr.bf16.mxu0 0
          %352 = vmatpush1.bf16.msra.mxu0 0
          %353 = vmatprep.subr.bf16.mxu0 0
          %354 = vmatpush1.bf16.msra.mxu0 0
          %355 = vmatprep.subr.bf16.mxu0 0
          %356 = vmatpush1.bf16.msra.mxu0 0
          %357 = vmatprep.subr.bf16.mxu0 0
          %358 = vmatpush1.bf16.msra.mxu0 0
          %359 = vmatprep.subr.bf16.mxu0 0
          %360 = vmatpush1.bf16.msra.mxu0 0
          %361 = vmatprep.subr.bf16.mxu0 0
          %362 = vmatpush1.bf16.msra.mxu0 0
          %363 = vmatprep.subr.bf16.mxu0 0
          %364 = vmatpush1.bf16.msra.mxu0 0
          %365 = vmatprep.subr.bf16.mxu0 0
          %366 = vmatpush1.bf16.msra.mxu0 0
          %367 = vmatprep.subr.bf16.mxu0 0
          %368 = vmatpush1.bf16.msra.mxu0 0
          %369 = vmatprep.subr.bf16.mxu0 0
          %370 = vmatpush1.bf16.msra.mxu0 0
          %371 = vmatprep.subr.bf16.mxu0 0
          %372 = vmatpush1.bf16.msra.mxu0 0
          %373 = vmatprep.mubr.bf16.mxu0 0
          %374 = vmatmul.mubr.bf16.gmra.mrb[0].mxu0 %v339
          %v375 = vpop.f32.mrb[0].mxu0
          %v376 = vadd.f32 0.0, %v375
          %v377 = vpop.f32.mrb[0].mxu0
          %v378 = vpop.f32.mrb[0].mxu0
          %v379 = vpop.f32.mrb[0].mxu0
          %380 = vdwg.mxu0
          %v381 = vpack.c.bf16 %v376, %v376
          %vm382 = vcmask 519168
          %383 = vst.msk [vmem:[#allocation2] sm:$0xf] %vm382, %v381
        $region56: #{tpu_custom_call.1} parent=39 // pred_fallthru
          _
        %s384 = smul.u32 %s28, 8
        %s385 = sshra.s32 %s384, 3
        %s386 = sand.u32 %s384, 7
        %s387 = smul.addr %s385, 4
        %s388 = scalar_lea.vmem %s262, %s387 [#allocation4]
        %v389 = vld [vmem:[%s388] sm:$0xf]
        %v390 = vld [vmem:[#allocation7] sm:$0xf]
        %v391 = vld [vmem:[#allocation7 + $0x4] sm:$0xf]
        %v392 = vld [vmem:[#allocation7 + $0x8] sm:$0xf]
        %v393 = vld [vmem:[#allocation7 + $0xc] sm:$0xf]
        %v398 = vunpack.c.l.b16 %v390
        %v399 = vunpack.c.l.b16 %v391
        %v400 = vunpack.c.l.b16 %v392
        %v401 = vunpack.c.l.b16 %v393
        %v402 = vpack.c.b16 %v399, %v398
        %v403 = vpack.c.b16 %v401, %v400
        %vm406 = vcmask 261120
        %v408 = vsel %vm406, %v389, 0
        %410 = vmatprep.subr.bf16.mxu0 0
        %411 = vmatpush1.bf16.msra.mxu0 %v402
        %412 = vmatprep.subr.bf16.mxu0 0
        %413 = vmatpush1.bf16.msra.mxu0 %v403
        %414 = vmatprep.subr.bf16.mxu0 0
        %415 = vmatpush1.bf16.msra.mxu0 0
        %416 = vmatprep.subr.bf16.mxu0 0
        %417 = vmatpush1.bf16.msra.mxu0 0
        %418 = vmatprep.subr.bf16.mxu0 0
        %419 = vmatpush1.bf16.msra.mxu0 0
        %420 = vmatprep.subr.bf16.mxu0 0
        %421 = vmatpush1.bf16.msra.mxu0 0
        %422 = vmatprep.subr.bf16.mxu0 0
        %423 = vmatpush1.bf16.msra.mxu0 0
        %424 = vmatprep.subr.bf16.mxu0 0
        %425 = vmatpush1.bf16.msra.mxu0 0
        %426 = vmatprep.subr.bf16.mxu0 0
        %427 = vmatpush1.bf16.msra.mxu0 0
        %428 = vmatprep.subr.bf16.mxu0 0
        %429 = vmatpush1.bf16.msra.mxu0 0
        %430 = vmatprep.subr.bf16.mxu0 0
        %431 = vmatpush1.bf16.msra.mxu0 0
        %432 = vmatprep.subr.bf16.mxu0 0
        %433 = vmatpush1.bf16.msra.mxu0 0
        %434 = vmatprep.subr.bf16.mxu0 0
        %435 = vmatpush1.bf16.msra.mxu0 0
        %436 = vmatprep.subr.bf16.mxu0 0
        %437 = vmatpush1.bf16.msra.mxu0 0
        %438 = vmatprep.subr.bf16.mxu0 0
        %439 = vmatpush1.bf16.msra.mxu0 0
        %440 = vmatprep.subr.bf16.mxu0 0
        %441 = vmatpush1.bf16.msra.mxu0 0
        %442 = vmatprep.mubr.bf16.mxu0 0
        %443 = vmatmul.mubr.bf16.gmra.mrb[0].mxu0 %v408
        %v444 = vpop.f32.mrb[0].mxu0
        %v445 = vadd.f32 0.0, %v444
        %v446 = vpop.f32.mrb[0].mxu0
        %v447 = vpop.f32.mrb[0].mxu0
        %v448 = vpop.f32.mrb[0].mxu0
        %449 = vdwg.mxu0
        %v450 = vmul.f32 %v445, 0.5
        %v451 = vpack.c.bf16 %v450, %v450
        %v452 = vld [vmem:[%s310] sm:$0xf]
        %v453 = vunpack.c.l.bf16 %v452
        %v454 = vmul.f32 %v453, -100000.0
        %v455 = vld [vmem:[#allocation2] sm:$0xf]
        %vm456 = vcmask 31744
        %v458 = vsel %vm456, %v451, 0
        %v461 = vsel %vm456, %v455, 0
        %463 = vmatprep.subr.bf16.mxu0 0
        %464 = vmatpush1.bf16.xpose.msra.mxu0 %v461
        %465 = vmatprep.subr.bf16.mxu0 0
        %466 = vmatpush1.bf16.xpose.msra.mxu0 0
        %467 = vmatprep.subr.bf16.mxu0 0
        %468 = vmatpush1.bf16.xpose.msra.mxu0 0
        %469 = vmatprep.subr.bf16.mxu0 0
        %470 = vmatpush1.bf16.xpose.msra.mxu0 0
        %471 = vmatprep.subr.bf16.mxu0 0
        %472 = vmatpush1.bf16.xpose.msra.mxu0 0
        %473 = vmatprep.subr.bf16.mxu0 0
        %474 = vmatpush1.bf16.xpose.msra.mxu0 0
        %475 = vmatprep.subr.bf16.mxu0 0
        %476 = vmatpush1.bf16.xpose.msra.mxu0 0
        %477 = vmatprep.subr.bf16.mxu0 0
        %478 = vmatpush1.bf16.xpose.msra.mxu0 0
        %479 = vmatprep.subr.bf16.mxu0 0
        %480 = vmatpush1.bf16.xpose.msra.mxu0 0
        %481 = vmatprep.subr.bf16.mxu0 0
        %482 = vmatpush1.bf16.xpose.msra.mxu0 0
        %483 = vmatprep.subr.bf16.mxu0 0
        %484 = vmatpush1.bf16.xpose.msra.mxu0 0
        %485 = vmatprep.subr.bf16.mxu0 0
        %486 = vmatpush1.bf16.xpose.msra.mxu0 0
        %487 = vmatprep.subr.bf16.mxu0 0
        %488 = vmatpush1.bf16.xpose.msra.mxu0 0
        %489 = vmatprep.subr.bf16.mxu0 0
        %490 = vmatpush1.bf16.xpose.msra.mxu0 0
        %491 = vmatprep.subr.bf16.mxu0 0
        %492 = vmatpush1.bf16.xpose.msra.mxu0 0
        %493 = vmatprep.subr.bf16.mxu0 0
        %494 = vmatpush1.bf16.xpose.msra.mxu0 0
        %495 = vmatprep.mubr.bf16.mxu0 0
        %496 = vmatmul.mubr.bf16.gmra.mrb[0].mxu0 %v458
        %v497 = vpop.f32.mrb[0].mxu0
        %v498 = vadd.f32 %v454, %v497
        %v499 = vpop.f32.mrb[0].mxu0
        %v500 = vpop.f32.mrb[0].mxu0
        %v501 = vpop.f32.mrb[0].mxu0
        %502 = vdwg.mxu0
        %vm503 = vcmask 64512
        %v504 = vsel %vm503, %v498, -inf
        %505 = vmax.xlane.f32.xlu0 %v504
        %v506 = vpop.xlane.xlu0 %505
        %v507 = vsub.f32 %v498, %v506
        %v508 = vmul.f32 %v507, 1.442695
        %v509 = vpow.pop %v508
        %v510 = vsel %vm503, %v509, 0.0
        %511 = vadd.xlane.f32.xlu0 %v510
        %v512 = vpop.xlane.xlu0 %511
        %v513 = vrcp.pop %v512
        %v514 = vmul.f32 %v509, %v513
        %v515 = vpack.c.bf16 %v514, %v514
        %v517 = vunpack.c.l.b16 %v455
        %v518 = vpack.c.b16 %v517, %v517
        %519 = vrot.lane.b32.xlu0 %v518, 96
        %v520 = vpop.permute.xlu0 %519
        %v522 = vsel %vm503, %v515, 0
        %vm524 = vcmask 1043456
        %v526 = vsel %vm524, %v520, 0
        %528 = vmatprep.subr.bf16.mxu0 0
        %529 = vmatpush1.bf16.msra.mxu0 %v526
        %530 = vmatprep.subr.bf16.mxu0 0
        %531 = vmatpush1.bf16.msra.mxu0 0
        %532 = vmatprep.subr.bf16.mxu0 0
        %533 = vmatpush1.bf16.msra.mxu0 0
        %534 = vmatprep.subr.bf16.mxu0 0
        %535 = vmatpush1.bf16.msra.mxu0 0
        %536 = vmatprep.subr.bf16.mxu0 0
        %537 = vmatpush1.bf16.msra.mxu0 0
        %538 = vmatprep.subr.bf16.mxu0 0
        %539 = vmatpush1.bf16.msra.mxu0 0
        %540 = vmatprep.subr.bf16.mxu0 0
        %541 = vmatpush1.bf16.msra.mxu0 0
        %542 = vmatprep.subr.bf16.mxu0 0
        %543 = vmatpush1.bf16.msra.mxu0 0
        %544 = vmatprep.subr.bf16.mxu0 0
        %545 = vmatpush1.bf16.msra.mxu0 0
        %546 = vmatprep.subr.bf16.mxu0 0
        %547 = vmatpush1.bf16.msra.mxu0 0
        %548 = vmatprep.subr.bf16.mxu0 0
        %549 = vmatpush1.bf16.msra.mxu0 0
        %550 = vmatprep.subr.bf16.mxu0 0
        %551 = vmatpush1.bf16.msra.mxu0 0
        %552 = vmatprep.subr.bf16.mxu0 0
        %553 = vmatpush1.bf16.msra.mxu0 0
        %554 = vmatprep.subr.bf16.mxu0 0
        %555 = vmatpush1.bf16.msra.mxu0 0
        %556 = vmatprep.subr.bf16.mxu0 0
        %557 = vmatpush1.bf16.msra.mxu0 0
        %558 = vmatprep.subr.bf16.mxu0 0
        %559 = vmatpush1.bf16.msra.mxu0 0
        %560 = vmatprep.mubr.bf16.mxu0 0
        %561 = vmatmul.mubr.bf16.gmra.mrb[0].mxu0 %v522
        %v562 = vpop.f32.mrb[0].mxu0
        %v563 = vadd.f32 0.0, %v562
        %v564 = vpop.f32.mrb[0].mxu0
        %v565 = vpop.f32.mrb[0].mxu0
        %v566 = vpop.f32.mrb[0].mxu0
        %567 = vdwg.mxu0
        %v568 = vpack.c.bf16 %v563, %v563
        %vm569 = vcmask 27648
        %570 = vst.msk [vmem:[#allocation3] sm:$0xf] %vm569, %v568
        %v571 = vld [vmem:[#allocation2] sm:$0xf]
        %573 = vrot.lane.b32.xlu0 %v451, 124
        %v574 = vpop.permute.xlu0 %573
        %v576 = vunpack.c.l.b16 %v571
        %v577 = vpack.c.b16 %v576, %v576
        %578 = vrot.lane.b32.xlu0 %v577, 124
        %v579 = vpop.permute.xlu0 %578
        %v581 = vsel %vm456, %v574, 0
        %v584 = vsel %vm456, %v579, 0
        %586 = vmatprep.subr.bf16.mxu0 0
        %587 = vmatpush1.bf16.xpose.msra.mxu0 %v584
        %588 = vmatprep.subr.bf16.mxu0 0
        %589 = vmatpush1.bf16.xpose.msra.mxu0 0
        %590 = vmatprep.subr.bf16.mxu0 0
        %591 = vmatpush1.bf16.xpose.msra.mxu0 0
        %592 = vmatprep.subr.bf16.mxu0 0
        %593 = vmatpush1.bf16.xpose.msra.mxu0 0
        %594 = vmatprep.subr.bf16.mxu0 0
        %595 = vmatpush1.bf16.xpose.msra.mxu0 0
        %596 = vmatprep.subr.bf16.mxu0 0
        %597 = vmatpush1.bf16.xpose.msra.mxu0 0
        %598 = vmatprep.subr.bf16.mxu0 0
        %599 = vmatpush1.bf16.xpose.msra.mxu0 0
        %600 = vmatprep.subr.bf16.mxu0 0
        %601 = vmatpush1.bf16.xpose.msra.mxu0 0
        %602 = vmatprep.subr.bf16.mxu0 0
        %603 = vmatpush1.bf16.xpose.msra.mxu0 0
        %604 = vmatprep.subr.bf16.mxu0 0
        %605 = vmatpush1.bf16.xpose.msra.mxu0 0
        %606 = vmatprep.subr.bf16.mxu0 0
        %607 = vmatpush1.bf16.xpose.msra.mxu0 0
        %608 = vmatprep.subr.bf16.mxu0 0
        %609 = vmatpush1.bf16.xpose.msra.mxu0 0
        %610 = vmatprep.subr.bf16.mxu0 0
        %611 = vmatpush1.bf16.xpose.msra.mxu0 0
        %612 = vmatprep.subr.bf16.mxu0 0
        %613 = vmatpush1.bf16.xpose.msra.mxu0 0
        %614 = vmatprep.subr.bf16.mxu0 0
        %615 = vmatpush1.bf16.xpose.msra.mxu0 0
        %616 = vmatprep.subr.bf16.mxu0 0
        %617 = vmatpush1.bf16.xpose.msra.mxu0 0
        %618 = vmatprep.mubr.bf16.mxu0 0
        %619 = vmatmul.mubr.bf16.gmra.mrb[0].mxu0 %v581
        %v620 = vpop.f32.mrb[0].mxu0
        %v621 = vadd.f32 %v454, %v620
        %v622 = vpop.f32.mrb[0].mxu0
        %v623 = vpop.f32.mrb[0].mxu0
        %v624 = vpop.f32.mrb[0].mxu0
        %625 = vdwg.mxu0
        %v626 = vsel %vm503, %v621, -inf
        %627 = vmax.xlane.f32.xlu0 %v626
        %v628 = vpop.xlane.xlu0 %627
        %v629 = vsub.f32 %v621, %v628
        %v630 = vmul.f32 %v629, 1.442695
        %v631 = vpow.pop %v630
        %v632 = vsel %vm503, %v631, 0.0
        %633 = vadd.xlane.f32.xlu0 %v632
        %v634 = vpop.xlane.xlu0 %633
        %v635 = vrcp.pop %v634
        %v636 = vmul.f32 %v631, %v635
        %v637 = vpack.c.bf16 %v636, %v636
        %638 = vrot.lane.b32.xlu0 %v577, 92
        %v639 = vpop.permute.xlu0 %638
        %v641 = vsel %vm503, %v637, 0
        %v644 = vsel %vm524, %v639, 0
        %646 = vmatprep.subr.bf16.mxu0 0
        %647 = vmatpush1.bf16.msra.mxu0 %v644
        %648 = vmatprep.subr.bf16.mxu0 0
        %649 = vmatpush1.bf16.msra.mxu0 0
        %650 = vmatprep.subr.bf16.mxu0 0
        %651 = vmatpush1.bf16.msra.mxu0 0
        %652 = vmatprep.subr.bf16.mxu0 0
        %653 = vmatpush1.bf16.msra.mxu0 0
        %654 = vmatprep.subr.bf16.mxu0 0
        %655 = vmatpush1.bf16.msra.mxu0 0
        %656 = vmatprep.subr.bf16.mxu0 0
        %657 = vmatpush1.bf16.msra.mxu0 0
        %658 = vmatprep.subr.bf16.mxu0 0
        %659 = vmatpush1.bf16.msra.mxu0 0
        %660 = vmatprep.subr.bf16.mxu0 0
        %661 = vmatpush1.bf16.msra.mxu0 0
        %662 = vmatprep.subr.bf16.mxu0 0
        %663 = vmatpush1.bf16.msra.mxu0 0
        %664 = vmatprep.subr.bf16.mxu0 0
        %665 = vmatpush1.bf16.msra.mxu0 0
        %666 = vmatprep.subr.bf16.mxu0 0
        %667 = vmatpush1.bf16.msra.mxu0 0
        %668 = vmatprep.subr.bf16.mxu0 0
        %669 = vmatpush1.bf16.msra.mxu0 0
        %670 = vmatprep.subr.bf16.mxu0 0
        %671 = vmatpush1.bf16.msra.mxu0 0
        %672 = vmatprep.subr.bf16.mxu0 0
        %673 = vmatpush1.bf16.msra.mxu0 0
        %674 = vmatprep.subr.bf16.mxu0 0
        %675 = vmatpush1.bf16.msra.mxu0 0
        %676 = vmatprep.subr.bf16.mxu0 0
        %677 = vmatpush1.bf16.msra.mxu0 0
        %678 = vmatprep.mubr.bf16.mxu0 0
        %679 = vmatmul.mubr.bf16.gmra.mrb[0].mxu0 %v641
        %v680 = vpop.f32.mrb[0].mxu0
        %v681 = vadd.f32 0.0, %v680
        %v682 = vpop.f32.mrb[0].mxu0
        %v683 = vpop.f32.mrb[0].mxu0
        %v684 = vpop.f32.mrb[0].mxu0
        %685 = vdwg.mxu0
        %v686 = vpack.c.bf16 %v681, %v681
        %v688 = vunpack.c.l.b16 %v686
        %v689 = vpack.c.b16 %v688, %v688
        %690 = vrot.lane.b32.xlu0 %v689, 4
        %v691 = vpop.permute.xlu0 %690
        %vm693 = vcmask 60448
        %694 = vst.msk [vmem:[#allocation3] sm:$0xf] %vm693, %v691
        %v695 = vld [vmem:[#allocation2] sm:$0xf]
        %696 = vrot.lane.b32.xlu0 %v451, 120
        %v697 = vpop.permute.xlu0 %696
        %v699 = vunpack.c.l.b16 %v695
        %v700 = vpack.c.b16 %v699, %v699
        %701 = vrot.lane.b32.xlu0 %v700, 120
        %v702 = vpop.permute.xlu0 %701
        %v704 = vsel %vm456, %v697, 0
        %v707 = vsel %vm456, %v702, 0
        %709 = vmatprep.subr.bf16.mxu0 0
        %710 = vmatpush1.bf16.xpose.msra.mxu0 %v707
        %711 = vmatprep.subr.bf16.mxu0 0
        %712 = vmatpush1.bf16.xpose.msra.mxu0 0
        %713 = vmatprep.subr.bf16.mxu0 0
        %714 = vmatpush1.bf16.xpose.msra.mxu0 0
        %715 = vmatprep.subr.bf16.mxu0 0
        %716 = vmatpush1.bf16.xpose.msra.mxu0 0
        %717 = vmatprep.subr.bf16.mxu0 0
        %718 = vmatpush1.bf16.xpose.msra.mxu0 0
        %719 = vmatprep.subr.bf16.mxu0 0
        %720 = vmatpush1.bf16.xpose.msra.mxu0 0
        %721 = vmatprep.subr.bf16.mxu0 0
        %722 = vmatpush1.bf16.xpose.msra.mxu0 0
        %723 = vmatprep.subr.bf16.mxu0 0
        %724 = vmatpush1.bf16.xpose.msra.mxu0 0
        %725 = vmatprep.subr.bf16.mxu0 0
        %726 = vmatpush1.bf16.xpose.msra.mxu0 0
        %727 = vmatprep.subr.bf16.mxu0 0
        %728 = vmatpush1.bf16.xpose.msra.mxu0 0
        %729 = vmatprep.subr.bf16.mxu0 0
        %730 = vmatpush1.bf16.xpose.msra.mxu0 0
        %731 = vmatprep.subr.bf16.mxu0 0
        %732 = vmatpush1.bf16.xpose.msra.mxu0 0
        %733 = vmatprep.subr.bf16.mxu0 0
        %734 = vmatpush1.bf16.xpose.msra.mxu0 0
        %735 = vmatprep.subr.bf16.mxu0 0
        %736 = vmatpush1.bf16.xpose.msra.mxu0 0
        %737 = vmatprep.subr.bf16.mxu0 0
        %738 = vmatpush1.bf16.xpose.msra.mxu0 0
        %739 = vmatprep.subr.bf16.mxu0 0
        %740 = vmatpush1.bf16.xpose.msra.mxu0 0
        %741 = vmatprep.mubr.bf16.mxu0 0
        %742 = vmatmul.mubr.bf16.gmra.mrb[0].mxu0 %v704
        %v743 = vpop.f32.mrb[0].mxu0
        %v744 = vadd.f32 %v454, %v743
        %v745 = vpop.f32.mrb[0].mxu0
        %v746 = vpop.f32.mrb[0].mxu0
        %v747 = vpop.f32.mrb[0].mxu0
        %748 = vdwg.mxu0
        %v749 = vsel %vm503, %v744, -inf
        %750 = vmax.xlane.f32.xlu0 %v749
        %v751 = vpop.xlane.xlu0 %750
        %v752 = vsub.f32 %v744, %v751
        %v753 = vmul.f32 %v752, 1.442695
        %v754 = vpow.pop %v753
        %v755 = vsel %vm503, %v754, 0.0
        %756 = vadd.xlane.f32.xlu0 %v755
        %v757 = vpop.xlane.xlu0 %756
        %v758 = vrcp.pop %v757
        %v759 = vmul.f32 %v754, %v758
        %v760 = vpack.c.bf16 %v759, %v759
        %761 = vrot.lane.b32.xlu0 %v700, 88
        %v762 = vpop.permute.xlu0 %761
        %v764 = vsel %vm503, %v760, 0
        %v767 = vsel %vm524, %v762, 0
        %769 = vmatprep.subr.bf16.mxu0 0
        %770 = vmatpush1.bf16.msra.mxu0 %v767
        %771 = vmatprep.subr.bf16.mxu0 0
        %772 = vmatpush1.bf16.msra.mxu0 0
        %773 = vmatprep.subr.bf16.mxu0 0
        %774 = vmatpush1.bf16.msra.mxu0 0
        %775 = vmatprep.subr.bf16.mxu0 0
        %776 = vmatpush1.bf16.msra.mxu0 0
        %777 = vmatprep.subr.bf16.mxu0 0
        %778 = vmatpush1.bf16.msra.mxu0 0
        %779 = vmatprep.subr.bf16.mxu0 0
        %780 = vmatpush1.bf16.msra.mxu0 0
        %781 = vmatprep.subr.bf16.mxu0 0
        %782 = vmatpush1.bf16.msra.mxu0 0
        %783 = vmatprep.subr.bf16.mxu0 0
        %784 = vmatpush1.bf16.msra.mxu0 0
        %785 = vmatprep.subr.bf16.mxu0 0
        %786 = vmatpush1.bf16.msra.mxu0 0
        %787 = vmatprep.subr.bf16.mxu0 0
        %788 = vmatpush1.bf16.msra.mxu0 0
        %789 = vmatprep.subr.bf16.mxu0 0
        %790 = vmatpush1.bf16.msra.mxu0 0
        %791 = vmatprep.subr.bf16.mxu0 0
        %792 = vmatpush1.bf16.msra.mxu0 0
        %793 = vmatprep.subr.bf16.mxu0 0
        %794 = vmatpush1.bf16.msra.mxu0 0
        %795 = vmatprep.subr.bf16.mxu0 0
        %796 = vmatpush1.bf16.msra.mxu0 0
        %797 = vmatprep.subr.bf16.mxu0 0
        %798 = vmatpush1.bf16.msra.mxu0 0
        %799 = vmatprep.subr.bf16.mxu0 0
        %800 = vmatpush1.bf16.msra.mxu0 0
        %801 = vmatprep.mubr.bf16.mxu0 0
        %802 = vmatmul.mubr.bf16.gmra.mrb[0].mxu0 %v764
        %v803 = vpop.f32.mrb[0].mxu0
        %v804 = vadd.f32 0.0, %v803
        %v805 = vpop.f32.mrb[0].mxu0
        %v806 = vpop.f32.mrb[0].mxu0
        %v807 = vpop.f32.mrb[0].mxu0
        %808 = vdwg.mxu0
        %v809 = vpack.c.bf16 %v804, %v804
        %v811 = vunpack.c.l.b16 %v809
        %v812 = vpack.c.b16 %v811, %v811
        %813 = vrot.lane.b32.xlu0 %v812, 8
        %v814 = vpop.permute.xlu0 %813
        %vm816 = vcmask 93248
        %817 = vst.msk [vmem:[#allocation3] sm:$0xf] %vm816, %v814
        %v818 = vld [vmem:[#allocation2] sm:$0xf]
        %819 = vrot.lane.b32.xlu0 %v451, 116
        %v820 = vpop.permute.xlu0 %819
        %v822 = vunpack.c.l.b16 %v818
        %v823 = vpack.c.b16 %v822, %v822
        %824 = vrot.lane.b32.xlu0 %v823, 116
        %v825 = vpop.permute.xlu0 %824
        %v827 = vsel %vm456, %v820, 0
        %v830 = vsel %vm456, %v825, 0
        %832 = vmatprep.subr.bf16.mxu0 0
        %833 = vmatpush1.bf16.xpose.msra.mxu0 %v830
        %834 = vmatprep.subr.bf16.mxu0 0
        %835 = vmatpush1.bf16.xpose.msra.mxu0 0
        %836 = vmatprep.subr.bf16.mxu0 0
        %837 = vmatpush1.bf16.xpose.msra.mxu0 0
        %838 = vmatprep.subr.bf16.mxu0 0
        %839 = vmatpush1.bf16.xpose.msra.mxu0 0
        %840 = vmatprep.subr.bf16.mxu0 0
        %841 = vmatpush1.bf16.xpose.msra.mxu0 0
        %842 = vmatprep.subr.bf16.mxu0 0
        %843 = vmatpush1.bf16.xpose.msra.mxu0 0
        %844 = vmatprep.subr.bf16.mxu0 0
        %845 = vmatpush1.bf16.xpose.msra.mxu0 0
        %846 = vmatprep.subr.bf16.mxu0 0
        %847 = vmatpush1.bf16.xpose.msra.mxu0 0
        %848 = vmatprep.subr.bf16.mxu0 0
        %849 = vmatpush1.bf16.xpose.msra.mxu0 0
        %850 = vmatprep.subr.bf16.mxu0 0
        %851 = vmatpush1.bf16.xpose.msra.mxu0 0
        %852 = vmatprep.subr.bf16.mxu0 0
        %853 = vmatpush1.bf16.xpose.msra.mxu0 0
        %854 = vmatprep.subr.bf16.mxu0 0
        %855 = vmatpush1.bf16.xpose.msra.mxu0 0
        %856 = vmatprep.subr.bf16.mxu0 0
        %857 = vmatpush1.bf16.xpose.msra.mxu0 0
        %858 = vmatprep.subr.bf16.mxu0 0
        %859 = vmatpush1.bf16.xpose.msra.mxu0 0
        %860 = vmatprep.subr.bf16.mxu0 0
        %861 = vmatpush1.bf16.xpose.msra.mxu0 0
        %862 = vmatprep.subr.bf16.mxu0 0
        %863 = vmatpush1.bf16.xpose.msra.mxu0 0
        %864 = vmatprep.mubr.bf16.mxu0 0
        %865 = vmatmul.mubr.bf16.gmra.mrb[0].mxu0 %v827
        %v866 = vpop.f32.mrb[0].mxu0
        %v867 = vadd.f32 %v454, %v866
        %v868 = vpop.f32.mrb[0].mxu0
        %v869 = vpop.f32.mrb[0].mxu0
        %v870 = vpop.f32.mrb[0].mxu0
        %871 = vdwg.mxu0
        %v872 = vsel %vm503, %v867, -inf
        %873 = vmax.xlane.f32.xlu0 %v872
        %v874 = vpop.xlane.xlu0 %873
        %v875 = vsub.f32 %v867, %v874
        %v876 = vmul.f32 %v875, 1.442695
        %v877 = vpow.pop %v876
        %v878 = vsel %vm503, %v877, 0.0
        %879 = vadd.xlane.f32.xlu0 %v878
        %v880 = vpop.xlane.xlu0 %879
        %v881 = vrcp.pop %v880
        %v882 = vmul.f32 %v877, %v881
        %v883 = vpack.c.bf16 %v882, %v882
        %884 = vrot.lane.b32.xlu0 %v823, 84
        %v885 = vpop.permute.xlu0 %884
        %v887 = vsel %vm503, %v883, 0
        %v890 = vsel %vm524, %v885, 0
        %892 = vmatprep.subr.bf16.mxu0 0
        %893 = vmatpush1.bf16.msra.mxu0 %v890
        %894 = vmatprep.subr.bf16.mxu0 0
        %895 = vmatpush1.bf16.msra.mxu0 0
        %896 = vmatprep.subr.bf16.mxu0 0
        %897 = vmatpush1.bf16.msra.mxu0 0
        %898 = vmatprep.subr.bf16.mxu0 0
        %899 = vmatpush1.bf16.msra.mxu0 0
        %900 = vmatprep.subr.bf16.mxu0 0
        %901 = vmatpush1.bf16.msra.mxu0 0
        %902 = vmatprep.subr.bf16.mxu0 0
        %903 = vmatpush1.bf16.msra.mxu0 0
        %904 = vmatprep.subr.bf16.mxu0 0
        %905 = vmatpush1.bf16.msra.mxu0 0
        %906 = vmatprep.subr.bf16.mxu0 0
        %907 = vmatpush1.bf16.msra.mxu0 0
        %908 = vmatprep.subr.bf16.mxu0 0
        %909 = vmatpush1.bf16.msra.mxu0 0
        %910 = vmatprep.subr.bf16.mxu0 0
        %911 = vmatpush1.bf16.msra.mxu0 0
        %912 = vmatprep.subr.bf16.mxu0 0
        %913 = vmatpush1.bf16.msra.mxu0 0
        %914 = vmatprep.subr.bf16.mxu0 0
        %915 = vmatpush1.bf16.msra.mxu0 0
        %916 = vmatprep.subr.bf16.mxu0 0
        %917 = vmatpush1.bf16.msra.mxu0 0
        %918 = vmatprep.subr.bf16.mxu0 0
        %919 = vmatpush1.bf16.msra.mxu0 0
        %920 = vmatprep.subr.bf16.mxu0 0
        %921 = vmatpush1.bf16.msra.mxu0 0
        %922 = vmatprep.subr.bf16.mxu0 0
        %923 = vmatpush1.bf16.msra.mxu0 0
        %924 = vmatprep.mubr.bf16.mxu0 0
        %925 = vmatmul.mubr.bf16.gmra.mrb[0].mxu0 %v887
        %v926 = vpop.f32.mrb[0].mxu0
        %v927 = vadd.f32 0.0, %v926
        %v928 = vpop.f32.mrb[0].mxu0
        %v929 = vpop.f32.mrb[0].mxu0
        %v930 = vpop.f32.mrb[0].mxu0
        %931 = vdwg.mxu0
        %v932 = vpack.c.bf16 %v927, %v927
        %v934 = vunpack.c.l.b16 %v932
        %v935 = vpack.c.b16 %v934, %v934
        %936 = vrot.lane.b32.xlu0 %v935, 12
        %v937 = vpop.permute.xlu0 %936
        %vm939 = vcmask 126048
        %940 = vst.msk [vmem:[#allocation3] sm:$0xf] %vm939, %v937
        %v941 = vld [vmem:[#allocation2] sm:$0xf]
        %942 = vrot.lane.b32.xlu0 %v451, 112
        %v943 = vpop.permute.xlu0 %942
        %v945 = vunpack.c.l.b16 %v941
        %v946 = vpack.c.b16 %v945, %v945
        %947 = vrot.lane.b32.xlu0 %v946, 112
        %v948 = vpop.permute.xlu0 %947
        %v950 = vsel %vm456, %v943, 0
        %v953 = vsel %vm456, %v948, 0
        %955 = vmatprep.subr.bf16.mxu0 0
        %956 = vmatpush1.bf16.xpose.msra.mxu0 %v953
        %957 = vmatprep.subr.bf16.mxu0 0
        %958 = vmatpush1.bf16.xpose.msra.mxu0 0
        %959 = vmatprep.subr.bf16.mxu0 0
        %960 = vmatpush1.bf16.xpose.msra.mxu0 0
        %961 = vmatprep.subr.bf16.mxu0 0
        %962 = vmatpush1.bf16.xpose.msra.mxu0 0
        %963 = vmatprep.subr.bf16.mxu0 0
        %964 = vmatpush1.bf16.xpose.msra.mxu0 0
        %965 = vmatprep.subr.bf16.mxu0 0
        %966 = vmatpush1.bf16.xpose.msra.mxu0 0
        %967 = vmatprep.subr.bf16.mxu0 0
        %968 = vmatpush1.bf16.xpose.msra.mxu0 0
        %969 = vmatprep.subr.bf16.mxu0 0
        %970 = vmatpush1.bf16.xpose.msra.mxu0 0
        %971 = vmatprep.subr.bf16.mxu0 0
        %972 = vmatpush1.bf16.xpose.msra.mxu0 0
        %973 = vmatprep.subr.bf16.mxu0 0
        %974 = vmatpush1.bf16.xpose.msra.mxu0 0
        %975 = vmatprep.subr.bf16.mxu0 0
        %976 = vmatpush1.bf16.xpose.msra.mxu0 0
        %977 = vmatprep.subr.bf16.mxu0 0
        %978 = vmatpush1.bf16.xpose.msra.mxu0 0
        %979 = vmatprep.subr.bf16.mxu0 0
        %980 = vmatpush1.bf16.xpose.msra.mxu0 0
        %981 = vmatprep.subr.bf16.mxu0 0
        %982 = vmatpush1.bf16.xpose.msra.mxu0 0
        %983 = vmatprep.subr.bf16.mxu0 0
        %984 = vmatpush1.bf16.xpose.msra.mxu0 0
        %985 = vmatprep.subr.bf16.mxu0 0
        %986 = vmatpush1.bf16.xpose.msra.mxu0 0
        %987 = vmatprep.mubr.bf16.mxu0 0
        %988 = vmatmul.mubr.bf16.gmra.mrb[0].mxu0 %v950
        %v989 = vpop.f32.mrb[0].mxu0
        %v990 = vadd.f32 %v454, %v989
        %v991 = vpop.f32.mrb[0].mxu0
        %v992 = vpop.f32.mrb[0].mxu0
        %v993 = vpop.f32.mrb[0].mxu0
        %994 = vdwg.mxu0
        %v995 = vsel %vm503, %v990, -inf
        %996 = vmax.xlane.f32.xlu0 %v995
        %v997 = vpop.xlane.xlu0 %996
        %v998 = vsub.f32 %v990, %v997
        %v999 = vmul.f32 %v998, 1.442695
        %v1000 = vpow.pop %v999
        %v1001 = vsel %vm503, %v1000, 0.0
        %1002 = vadd.xlane.f32.xlu0 %v1001
        %v1003 = vpop.xlane.xlu0 %1002
        %v1004 = vrcp.pop %v1003
        %v1005 = vmul.f32 %v1000, %v1004
        %v1006 = vpack.c.bf16 %v1005, %v1005
        %1007 = vrot.lane.b32.xlu0 %v946, 80
        %v1008 = vpop.permute.xlu0 %1007
        %v1010 = vsel %vm503, %v1006, 0
        %v1013 = vsel %vm524, %v1008, 0
        %1015 = vmatprep.subr.bf16.mxu0 0
        %1016 = vmatpush1.bf16.msra.mxu0 %v1013
        %1017 = vmatprep.subr.bf16.mxu0 0
        %1018 = vmatpush1.bf16.msra.mxu0 0
        %1019 = vmatprep.subr.bf16.mxu0 0
        %1020 = vmatpush1.bf16.msra.mxu0 0
        %1021 = vmatprep.subr.bf16.mxu0 0
        %1022 = vmatpush1.bf16.msra.mxu0 0
        %1023 = vmatprep.subr.bf16.mxu0 0
        %1024 = vmatpush1.bf16.msra.mxu0 0
        %1025 = vmatprep.subr.bf16.mxu0 0
        %1026 = vmatpush1.bf16.msra.mxu0 0
        %1027 = vmatprep.subr.bf16.mxu0 0
        %1028 = vmatpush1.bf16.msra.mxu0 0
        %1029 = vmatprep.subr.bf16.mxu0 0
        %1030 = vmatpush1.bf16.msra.mxu0 0
        %1031 = vmatprep.subr.bf16.mxu0 0
        %1032 = vmatpush1.bf16.msra.mxu0 0
        %1033 = vmatprep.subr.bf16.mxu0 0
        %1034 = vmatpush1.bf16.msra.mxu0 0
        %1035 = vmatprep.subr.bf16.mxu0 0
        %1036 = vmatpush1.bf16.msra.mxu0 0
        %1037 = vmatprep.subr.bf16.mxu0 0
        %1038 = vmatpush1.bf16.msra.mxu0 0
        %1039 = vmatprep.subr.bf16.mxu0 0
        %1040 = vmatpush1.bf16.msra.mxu0 0
        %1041 = vmatprep.subr.bf16.mxu0 0
        %1042 = vmatpush1.bf16.msra.mxu0 0
        %1043 = vmatprep.subr.bf16.mxu0 0
        %1044 = vmatpush1.bf16.msra.mxu0 0
        %1045 = vmatprep.subr.bf16.mxu0 0
        %1046 = vmatpush1.bf16.msra.mxu0 0
        %1047 = vmatprep.mubr.bf16.mxu0 0
        %1048 = vmatmul.mubr.bf16.gmra.mrb[0].mxu0 %v1010
        %v1049 = vpop.f32.mrb[0].mxu0
        %v1050 = vadd.f32 0.0, %v1049
        %v1051 = vpop.f32.mrb[0].mxu0
        %v1052 = vpop.f32.mrb[0].mxu0
        %v1053 = vpop.f32.mrb[0].mxu0
        %1054 = vdwg.mxu0
        %v1055 = vpack.c.bf16 %v1050, %v1050
        %v1057 = vunpack.c.l.b16 %v1055
        %v1058 = vpack.c.b16 %v1057, %v1057
        %1059 = vrot.lane.b32.xlu0 %v1058, 16
        %v1060 = vpop.permute.xlu0 %1059
        %vm1062 = vcmask 158848
        %1063 = vst.msk [vmem:[#allocation3] sm:$0xf] %vm1062, %v1060
        %v1064 = vld [vmem:[#allocation2] sm:$0xf]
        %1065 = vrot.lane.b32.xlu0 %v451, 108
        %v1066 = vpop.permute.xlu0 %1065
        %v1068 = vunpack.c.l.b16 %v1064
        %v1069 = vpack.c.b16 %v1068, %v1068
        %1070 = vrot.lane.b32.xlu0 %v1069, 108
        %v1071 = vpop.permute.xlu0 %1070
        %v1073 = vsel %vm456, %v1066, 0
        %v1076 = vsel %vm456, %v1071, 0
        %1078 = vmatprep.subr.bf16.mxu0 0
        %1079 = vmatpush1.bf16.xpose.msra.mxu0 %v1076
        %1080 = vmatprep.subr.bf16.mxu0 0
        %1081 = vmatpush1.bf16.xpose.msra.mxu0 0
        %1082 = vmatprep.subr.bf16.mxu0 0
        %1083 = vmatpush1.bf16.xpose.msra.mxu0 0
        %1084 = vmatprep.subr.bf16.mxu0 0
        %1085 = vmatpush1.bf16.xpose.msra.mxu0 0
        %1086 = vmatprep.subr.bf16.mxu0 0
        %1087 = vmatpush1.bf16.xpose.msra.mxu0 0
        %1088 = vmatprep.subr.bf16.mxu0 0
        %1089 = vmatpush1.bf16.xpose.msra.mxu0 0
        %1090 = vmatprep.subr.bf16.mxu0 0
        %1091 = vmatpush1.bf16.xpose.msra.mxu0 0
        %1092 = vmatprep.subr.bf16.mxu0 0
        %1093 = vmatpush1.bf16.xpose.msra.mxu0 0
        %1094 = vmatprep.subr.bf16.mxu0 0
        %1095 = vmatpush1.bf16.xpose.msra.mxu0 0
        %1096 = vmatprep.subr.bf16.mxu0 0
        %1097 = vmatpush1.bf16.xpose.msra.mxu0 0
        %1098 = vmatprep.subr.bf16.mxu0 0
        %1099 = vmatpush1.bf16.xpose.msra.mxu0 0
        %1100 = vmatprep.subr.bf16.mxu0 0
        %1101 = vmatpush1.bf16.xpose.msra.mxu0 0
        %1102 = vmatprep.subr.bf16.mxu0 0
        %1103 = vmatpush1.bf16.xpose.msra.mxu0 0
        %1104 = vmatprep.subr.bf16.mxu0 0
        %1105 = vmatpush1.bf16.xpose.msra.mxu0 0
        %1106 = vmatprep.subr.bf16.mxu0 0
        %1107 = vmatpush1.bf16.xpose.msra.mxu0 0
        %1108 = vmatprep.subr.bf16.mxu0 0
        %1109 = vmatpush1.bf16.xpose.msra.mxu0 0
        %1110 = vmatprep.mubr.bf16.mxu0 0
        %1111 = vmatmul.mubr.bf16.gmra.mrb[0].mxu0 %v1073
        %v1112 = vpop.f32.mrb[0].mxu0
        %v1113 = vadd.f32 %v454, %v1112
        %v1114 = vpop.f32.mrb[0].mxu0
        %v1115 = vpop.f32.mrb[0].mxu0
        %v1116 = vpop.f32.mrb[0].mxu0
        %1117 = vdwg.mxu0
        %v1118 = vsel %vm503, %v1113, -inf
        %1119 = vmax.xlane.f32.xlu0 %v1118
        %v1120 = vpop.xlane.xlu0 %1119
        %v1121 = vsub.f32 %v1113, %v1120
        %v1122 = vmul.f32 %v1121, 1.442695
        %v1123 = vpow.pop %v1122
        %v1124 = vsel %vm503, %v1123, 0.0
        %1125 = vadd.xlane.f32.xlu0 %v1124
        %v1126 = vpop.xlane.xlu0 %1125
        %v1127 = vrcp.pop %v1126
        %v1128 = vmul.f32 %v1123, %v1127
        %v1129 = vpack.c.bf16 %v1128, %v1128
        %1130 = vrot.lane.b32.xlu0 %v1069, 76
        %v1131 = vpop.permute.xlu0 %1130
        %v1133 = vsel %vm503, %v1129, 0
        %v1136 = vsel %vm524, %v1131, 0
        %1138 = vmatprep.subr.bf16.mxu0 0
        %1139 = vmatpush1.bf16.msra.mxu0 %v1136
        %1140 = vmatprep.subr.bf16.mxu0 0
        %1141 = vmatpush1.bf16.msra.mxu0 0
        %1142 = vmatprep.subr.bf16.mxu0 0
        %1143 = vmatpush1.bf16.msra.mxu0 0
        %1144 = vmatprep.subr.bf16.mxu0 0
        %1145 = vmatpush1.bf16.msra.mxu0 0
        %1146 = vmatprep.subr.bf16.mxu0 0
        %1147 = vmatpush1.bf16.msra.mxu0 0
        %1148 = vmatprep.subr.bf16.mxu0 0
        %1149 = vmatpush1.bf16.msra.mxu0 0
        %1150 = vmatprep.subr.bf16.mxu0 0
        %1151 = vmatpush1.bf16.msra.mxu0 0
        %1152 = vmatprep.subr.bf16.mxu0 0
        %1153 = vmatpush1.bf16.msra.mxu0 0
        %1154 = vmatprep.subr.bf16.mxu0 0
        %1155 = vmatpush1.bf16.msra.mxu0 0
        %1156 = vmatprep.subr.bf16.mxu0 0
        %1157 = vmatpush1.bf16.msra.mxu0 0
        %1158 = vmatprep.subr.bf16.mxu0 0
        %1159 = vmatpush1.bf16.msra.mxu0 0
        %1160 = vmatprep.subr.bf16.mxu0 0
        %1161 = vmatpush1.bf16.msra.mxu0 0
        %1162 = vmatprep.subr.bf16.mxu0 0
        %1163 = vmatpush1.bf16.msra.mxu0 0
        %1164 = vmatprep.subr.bf16.mxu0 0
        %1165 = vmatpush1.bf16.msra.mxu0 0
        %1166 = vmatprep.subr.bf16.mxu0 0
        %1167 = vmatpush1.bf16.msra.mxu0 0
        %1168 = vmatprep.subr.bf16.mxu0 0
        %1169 = vmatpush1.bf16.msra.mxu0 0
        %1170 = vmatprep.mubr.bf16.mxu0 0
        %1171 = vmatmul.mubr.bf16.gmra.mrb[0].mxu0 %v1133
        %v1172 = vpop.f32.mrb[0].mxu0
        %v1173 = vadd.f32 0.0, %v1172
        %v1174 = vpop.f32.mrb[0].mxu0
        %v1175 = vpop.f32.mrb[0].mxu0
        %v1176 = vpop.f32.mrb[0].mxu0
        %1177 = vdwg.mxu0
        %v1178 = vpack.c.bf16 %v1173, %v1173
        %v1180 = vunpack.c.l.b16 %v1178
        %v1181 = vpack.c.b16 %v1180, %v1180
        %1182 = vrot.lane.b32.xlu0 %v1181, 20
        %v1183 = vpop.permute.xlu0 %1182
        %vm1185 = vcmask 191648
        %1186 = vst.msk [vmem:[#allocation3] sm:$0xf] %vm1185, %v1183
        %v1187 = vld [vmem:[#allocation2] sm:$0xf]
        %1188 = vrot.lane.b32.xlu0 %v451, 104
        %v1189 = vpop.permute.xlu0 %1188
        %v1191 = vunpack.c.l.b16 %v1187
        %v1192 = vpack.c.b16 %v1191, %v1191
        %1193 = vrot.lane.b32.xlu0 %v1192, 104
        %v1194 = vpop.permute.xlu0 %1193
        %v1196 = vsel %vm456, %v1189, 0
        %v1199 = vsel %vm456, %v1194, 0
        %1201 = vmatprep.subr.bf16.mxu0 0
        %1202 = vmatpush1.bf16.xpose.msra.mxu0 %v1199
        %1203 = vmatprep.subr.bf16.mxu0 0
        %1204 = vmatpush1.bf16.xpose.msra.mxu0 0
        %1205 = vmatprep.subr.bf16.mxu0 0
        %1206 = vmatpush1.bf16.xpose.msra.mxu0 0
        %1207 = vmatprep.subr.bf16.mxu0 0
        %1208 = vmatpush1.bf16.xpose.msra.mxu0 0
        %1209 = vmatprep.subr.bf16.mxu0 0
        %1210 = vmatpush1.bf16.xpose.msra.mxu0 0
        %1211 = vmatprep.subr.bf16.mxu0 0
        %1212 = vmatpush1.bf16.xpose.msra.mxu0 0
        %1213 = vmatprep.subr.bf16.mxu0 0
        %1214 = vmatpush1.bf16.xpose.msra.mxu0 0
        %1215 = vmatprep.subr.bf16.mxu0 0
        %1216 = vmatpush1.bf16.xpose.msra.mxu0 0
        %1217 = vmatprep.subr.bf16.mxu0 0
        %1218 = vmatpush1.bf16.xpose.msra.mxu0 0
        %1219 = vmatprep.subr.bf16.mxu0 0
        %1220 = vmatpush1.bf16.xpose.msra.mxu0 0
        %1221 = vmatprep.subr.bf16.mxu0 0
        %1222 = vmatpush1.bf16.xpose.msra.mxu0 0
        %1223 = vmatprep.subr.bf16.mxu0 0
        %1224 = vmatpush1.bf16.xpose.msra.mxu0 0
        %1225 = vmatprep.subr.bf16.mxu0 0
        %1226 = vmatpush1.bf16.xpose.msra.mxu0 0
        %1227 = vmatprep.subr.bf16.mxu0 0
        %1228 = vmatpush1.bf16.xpose.msra.mxu0 0
        %1229 = vmatprep.subr.bf16.mxu0 0
        %1230 = vmatpush1.bf16.xpose.msra.mxu0 0
        %1231 = vmatprep.subr.bf16.mxu0 0
        %1232 = vmatpush1.bf16.xpose.msra.mxu0 0
        %1233 = vmatprep.mubr.bf16.mxu0 0
        %1234 = vmatmul.mubr.bf16.gmra.mrb[0].mxu0 %v1196
        %v1235 = vpop.f32.mrb[0].mxu0
        %v1236 = vadd.f32 %v454, %v1235
        %v1237 = vpop.f32.mrb[0].mxu0
        %v1238 = vpop.f32.mrb[0].mxu0
        %v1239 = vpop.f32.mrb[0].mxu0
        %1240 = vdwg.mxu0
        %v1241 = vsel %vm503, %v1236, -inf
        %1242 = vmax.xlane.f32.xlu0 %v1241
        %v1243 = vpop.xlane.xlu0 %1242
        %v1244 = vsub.f32 %v1236, %v1243
        %v1245 = vmul.f32 %v1244, 1.442695
        %v1246 = vpow.pop %v1245
        %v1247 = vsel %vm503, %v1246, 0.0
        %1248 = vadd.xlane.f32.xlu0 %v1247
        %v1249 = vpop.xlane.xlu0 %1248
        %v1250 = vrcp.pop %v1249
        %v1251 = vmul.f32 %v1246, %v1250
        %v1252 = vpack.c.bf16 %v1251, %v1251
        %1253 = vrot.lane.b32.xlu0 %v1192, 72
        %v1254 = vpop.permute.xlu0 %1253
        %v1256 = vsel %vm503, %v1252, 0
        %v1259 = vsel %vm524, %v1254, 0
        %1261 = vmatprep.subr.bf16.mxu0 0
        %1262 = vmatpush1.bf16.msra.mxu0 %v1259
        %1263 = vmatprep.subr.bf16.mxu0 0
        %1264 = vmatpush1.bf16.msra.mxu0 0
        %1265 = vmatprep.subr.bf16.mxu0 0
        %1266 = vmatpush1.bf16.msra.mxu0 0
        %1267 = vmatprep.subr.bf16.mxu0 0
        %1268 = vmatpush1.bf16.msra.mxu0 0
        %1269 = vmatprep.subr.bf16.mxu0 0
        %1270 = vmatpush1.bf16.msra.mxu0 0
        %1271 = vmatprep.subr.bf16.mxu0 0
        %1272 = vmatpush1.bf16.msra.mxu0 0
        %1273 = vmatprep.subr.bf16.mxu0 0
        %1274 = vmatpush1.bf16.msra.mxu0 0
        %1275 = vmatprep.subr.bf16.mxu0 0
        %1276 = vmatpush1.bf16.msra.mxu0 0
        %1277 = vmatprep.subr.bf16.mxu0 0
        %1278 = vmatpush1.bf16.msra.mxu0 0
        %1279 = vmatprep.subr.bf16.mxu0 0
        %1280 = vmatpush1.bf16.msra.mxu0 0
        %1281 = vmatprep.subr.bf16.mxu0 0
        %1282 = vmatpush1.bf16.msra.mxu0 0
        %1283 = vmatprep.subr.bf16.mxu0 0
        %1284 = vmatpush1.bf16.msra.mxu0 0
        %1285 = vmatprep.subr.bf16.mxu0 0
        %1286 = vmatpush1.bf16.msra.mxu0 0
        %1287 = vmatprep.subr.bf16.mxu0 0
        %1288 = vmatpush1.bf16.msra.mxu0 0
        %1289 = vmatprep.subr.bf16.mxu0 0
        %1290 = vmatpush1.bf16.msra.mxu0 0
        %1291 = vmatprep.subr.bf16.mxu0 0
        %1292 = vmatpush1.bf16.msra.mxu0 0
        %1293 = vmatprep.mubr.bf16.mxu0 0
        %1294 = vmatmul.mubr.bf16.gmra.mrb[0].mxu0 %v1256
        %v1295 = vpop.f32.mrb[0].mxu0
        %v1296 = vadd.f32 0.0, %v1295
        %v1297 = vpop.f32.mrb[0].mxu0
        %v1298 = vpop.f32.mrb[0].mxu0
        %v1299 = vpop.f32.mrb[0].mxu0
        %1300 = vdwg.mxu0
        %v1301 = vpack.c.bf16 %v1296, %v1296
        %v1303 = vunpack.c.l.b16 %v1301
        %v1304 = vpack.c.b16 %v1303, %v1303
        %1305 = vrot.lane.b32.xlu0 %v1304, 24
        %v1306 = vpop.permute.xlu0 %1305
        %vm1308 = vcmask 224448
        %1309 = vst.msk [vmem:[#allocation3] sm:$0xf] %vm1308, %v1306
        %v1310 = vld [vmem:[#allocation2] sm:$0xf]
        %1311 = vrot.lane.b32.xlu0 %v451, 100
        %v1312 = vpop.permute.xlu0 %1311
        %v1314 = vunpack.c.l.b16 %v1310
        %v1315 = vpack.c.b16 %v1314, %v1314
        %1316 = vrot.lane.b32.xlu0 %v1315, 100
        %v1317 = vpop.permute.xlu0 %1316
        %v1319 = vsel %vm456, %v1312, 0
        %v1322 = vsel %vm456, %v1317, 0
        %1324 = vmatprep.subr.bf16.mxu0 0
        %1325 = vmatpush1.bf16.xpose.msra.mxu0 %v1322
        %1326 = vmatprep.subr.bf16.mxu0 0
        %1327 = vmatpush1.bf16.xpose.msra.mxu0 0
        %1328 = vmatprep.subr.bf16.mxu0 0
        %1329 = vmatpush1.bf16.xpose.msra.mxu0 0
        %1330 = vmatprep.subr.bf16.mxu0 0
        %1331 = vmatpush1.bf16.xpose.msra.mxu0 0
        %1332 = vmatprep.subr.bf16.mxu0 0
        %1333 = vmatpush1.bf16.xpose.msra.mxu0 0
        %1334 = vmatprep.subr.bf16.mxu0 0
        %1335 = vmatpush1.bf16.xpose.msra.mxu0 0
        %1336 = vmatprep.subr.bf16.mxu0 0
        %1337 = vmatpush1.bf16.xpose.msra.mxu0 0
        %1338 = vmatprep.subr.bf16.mxu0 0
        %1339 = vmatpush1.bf16.xpose.msra.mxu0 0
        %1340 = vmatprep.subr.bf16.mxu0 0
        %1341 = vmatpush1.bf16.xpose.msra.mxu0 0
        %1342 = vmatprep.subr.bf16.mxu0 0
        %1343 = vmatpush1.bf16.xpose.msra.mxu0 0
        %1344 = vmatprep.subr.bf16.mxu0 0
        %1345 = vmatpush1.bf16.xpose.msra.mxu0 0
        %1346 = vmatprep.subr.bf16.mxu0 0
        %1347 = vmatpush1.bf16.xpose.msra.mxu0 0
        %1348 = vmatprep.subr.bf16.mxu0 0
        %1349 = vmatpush1.bf16.xpose.msra.mxu0 0
        %1350 = vmatprep.subr.bf16.mxu0 0
        %1351 = vmatpush1.bf16.xpose.msra.mxu0 0
        %1352 = vmatprep.subr.bf16.mxu0 0
        %1353 = vmatpush1.bf16.xpose.msra.mxu0 0
        %1354 = vmatprep.subr.bf16.mxu0 0
        %1355 = vmatpush1.bf16.xpose.msra.mxu0 0
        %1356 = vmatprep.mubr.bf16.mxu0 0
        %1357 = vmatmul.mubr.bf16.gmra.mrb[0].mxu0 %v1319
        %v1358 = vpop.f32.mrb[0].mxu0
        %v1359 = vadd.f32 %v454, %v1358
        %v1360 = vpop.f32.mrb[0].mxu0
        %v1361 = vpop.f32.mrb[0].mxu0
        %v1362 = vpop.f32.mrb[0].mxu0
        %1363 = vdwg.mxu0
        %v1364 = vsel %vm503, %v1359, -inf
        %1365 = vmax.xlane.f32.xlu0 %v1364
        %v1366 = vpop.xlane.xlu0 %1365
        %v1367 = vsub.f32 %v1359, %v1366
        %v1368 = vmul.f32 %v1367, 1.442695
        %v1369 = vpow.pop %v1368
        %v1370 = vsel %vm503, %v1369, 0.0
        %1371 = vadd.xlane.f32.xlu0 %v1370
        %v1372 = vpop.xlane.xlu0 %1371
        %v1373 = vrcp.pop %v1372
        %v1374 = vmul.f32 %v1369, %v1373
        %v1375 = vpack.c.bf16 %v1374, %v1374
        %1376 = vrot.lane.b32.xlu0 %v1315, 68
        %v1377 = vpop.permute.xlu0 %1376
        %v1379 = vsel %vm503, %v1375, 0
        %v1382 = vsel %vm524, %v1377, 0
        %1384 = vmatprep.subr.bf16.mxu0 0
        %1385 = vmatpush1.bf16.msra.mxu0 %v1382
        %1386 = vmatprep.subr.bf16.mxu0 0
        %1387 = vmatpush1.bf16.msra.mxu0 0
        %1388 = vmatprep.subr.bf16.mxu0 0
        %1389 = vmatpush1.bf16.msra.mxu0 0
        %1390 = vmatprep.subr.bf16.mxu0 0
        %1391 = vmatpush1.bf16.msra.mxu0 0
        %1392 = vmatprep.subr.bf16.mxu0 0
        %1393 = vmatpush1.bf16.msra.mxu0 0
        %1394 = vmatprep.subr.bf16.mxu0 0
        %1395 = vmatpush1.bf16.msra.mxu0 0
        %1396 = vmatprep.subr.bf16.mxu0 0
        %1397 = vmatpush1.bf16.msra.mxu0 0
        %1398 = vmatprep.subr.bf16.mxu0 0
        %1399 = vmatpush1.bf16.msra.mxu0 0
        %1400 = vmatprep.subr.bf16.mxu0 0
        %1401 = vmatpush1.bf16.msra.mxu0 0
        %1402 = vmatprep.subr.bf16.mxu0 0
        %1403 = vmatpush1.bf16.msra.mxu0 0
        %1404 = vmatprep.subr.bf16.mxu0 0
        %1405 = vmatpush1.bf16.msra.mxu0 0
        %1406 = vmatprep.subr.bf16.mxu0 0
        %1407 = vmatpush1.bf16.msra.mxu0 0
        %1408 = vmatprep.subr.bf16.mxu0 0
        %1409 = vmatpush1.bf16.msra.mxu0 0
        %1410 = vmatprep.subr.bf16.mxu0 0
        %1411 = vmatpush1.bf16.msra.mxu0 0
        %1412 = vmatprep.subr.bf16.mxu0 0
        %1413 = vmatpush1.bf16.msra.mxu0 0
        %1414 = vmatprep.subr.bf16.mxu0 0
        %1415 = vmatpush1.bf16.msra.mxu0 0
        %1416 = vmatprep.mubr.bf16.mxu0 0
        %1417 = vmatmul.mubr.bf16.gmra.mrb[0].mxu0 %v1379
        %v1418 = vpop.f32.mrb[0].mxu0
        %v1419 = vadd.f32 0.0, %v1418
        %v1420 = vpop.f32.mrb[0].mxu0
        %v1421 = vpop.f32.mrb[0].mxu0
        %v1422 = vpop.f32.mrb[0].mxu0
        %1423 = vdwg.mxu0
        %v1424 = vpack.c.bf16 %v1419, %v1419
        %v1426 = vunpack.c.l.b16 %v1424
        %v1427 = vpack.c.b16 %v1426, %v1426
        %1428 = vrot.lane.b32.xlu0 %v1427, 28
        %v1429 = vpop.permute.xlu0 %1428
        %vm1431 = vcmask 257248
        %1432 = vst.msk [vmem:[#allocation3] sm:$0xf] %vm1431, %v1429
        %v1433 = vld [vmem:[#allocation3] sm:$0xf]
        %v1434 = vld [vmem:[#allocation9] sm:$0xf]
        %v1435 = vld [vmem:[#allocation9 + $0x4] sm:$0xf]
        %v1436 = vld [vmem:[#allocation9 + $0x8] sm:$0xf]
        %v1437 = vld [vmem:[#allocation9 + $0xc] sm:$0xf]
        %v1438 = vld [vmem:[%s3] sm:$0x1]
        %v1440 = vlaneseq
        %v1441 = vshrl.u32 %v1440, 7
        %v1442 = vsub.s32 0, %v1441
        %v1443 = vrot.slane %v1438, %v1442
        %v1449 = vunpack.c.l.b16 %v1434
        %v1450 = vunpack.c.l.b16 %v1435
        %v1451 = vunpack.c.l.b16 %v1436
        %v1452 = vunpack.c.l.b16 %v1437
        %v1453 = vpack.c.b16 %v1450, %v1449
        %v1454 = vpack.c.b16 %v1452, %v1451
        %v1458 = vsel %vm406, %v1433, 0
        %1460 = vmatprep.subr.bf16.mxu0 0
        %1461 = vmatpush1.bf16.msra.mxu0 %v1453
        %1462 = vmatprep.subr.bf16.mxu0 0
        %1463 = vmatpush1.bf16.msra.mxu0 %v1454
        %1464 = vmatprep.subr.bf16.mxu0 0
        %1465 = vmatpush1.bf16.msra.mxu0 0
        %1466 = vmatprep.subr.bf16.mxu0 0
        %1467 = vmatpush1.bf16.msra.mxu0 0
        %1468 = vmatprep.subr.bf16.mxu0 0
        %1469 = vmatpush1.bf16.msra.mxu0 0
        %1470 = vmatprep.subr.bf16.mxu0 0
        %1471 = vmatpush1.bf16.msra.mxu0 0
        %1472 = vmatprep.subr.bf16.mxu0 0
        %1473 = vmatpush1.bf16.msra.mxu0 0
        %1474 = vmatprep.subr.bf16.mxu0 0
        %1475 = vmatpush1.bf16.msra.mxu0 0
        %1476 = vmatprep.subr.bf16.mxu0 0
        %1477 = vmatpush1.bf16.msra.mxu0 0
        %1478 = vmatprep.subr.bf16.mxu0 0
        %1479 = vmatpush1.bf16.msra.mxu0 0
        %1480 = vmatprep.subr.bf16.mxu0 0
        %1481 = vmatpush1.bf16.msra.mxu0 0
        %1482 = vmatprep.subr.bf16.mxu0 0
        %1483 = vmatpush1.bf16.msra.mxu0 0
        %1484 = vmatprep.subr.bf16.mxu0 0
        %1485 = vmatpush1.bf16.msra.mxu0 0
        %1486 = vmatprep.subr.bf16.mxu0 0
        %1487 = vmatpush1.bf16.msra.mxu0 0
        %1488 = vmatprep.subr.bf16.mxu0 0
        %1489 = vmatpush1.bf16.msra.mxu0 0
        %1490 = vmatprep.subr.bf16.mxu0 0
        %1491 = vmatpush1.bf16.msra.mxu0 0
        %1492 = vmatprep.mubr.bf16.mxu0 0
        %1493 = vmatmul.mubr.bf16.gmra.mrb[0].mxu0 %v1458
        %v1494 = vpop.f32.mrb[0].mxu0
        %v1495 = vadd.f32 %v1443, %v1494
        %v1496 = vpop.f32.mrb[0].mxu0
        %v1497 = vpop.f32.mrb[0].mxu0
        %v1498 = vpop.f32.mrb[0].mxu0
        %1499 = vdwg.mxu0
        %1500 = vst.msk [vmem:[%s303] sm:$0xff] %vm406, %v1495
        %s1501 = sand.u32 %s162, 1
        %s1502 = scalar_lea.sflag [#allocation6], %s1501
        %s1503 = sand.u32 %s162, 1
        %s1504 = smul.addr %s1503, 8
        %s1505 = scalar_lea.vmem [#allocation10], %s1504
        // Predicated region
        $region57: #{tpu_custom_call.1} parent=39 // pred_check
          %p1506 = pneg %p172
        $region58: #{tpu_custom_call.1} parent=39 // pred_check_branch
          %1508 = sbr.rel (%p1506) target = $region60
        $region59: #{tpu_custom_call.1} parent=39 // pred_region
          %s1510 = ssub.s32 128, 128
          %1511 = vsyncadd %s1502, %s1510
          %s1512 = sadd.s32 %s28, %s27
          %s1513 = smul.addr %s1512, 128
          %s1514 = scalar_lea.hbm %s5, %s1513
          %s1516 = sshll.u32 %s1505, 4
          %s1517 = int_to_ptr.vmem [resolvable:$true] %s1516
          %1519 = dma.vmem_to_hbm [thread:$0]  %s1517, 128, %s1514, %s1502
        $region60: #{tpu_custom_call.1} parent=39 // pred_fallthru
          _
      $region40: #{tpu_custom_call.1} parent=5 // pred_fallthru
        _
      %p1520 = scmp.le.s32.totalorder 2, %s18
      // Predicated region
      $region61: #{tpu_custom_call.1} parent=5 // pred_check
        %p1521 = pneg %p1520
      $region62: #{tpu_custom_call.1} parent=5 // pred_check_branch
        %1523 = sbr.rel (%p1521) target = $region64
      $region63: #{tpu_custom_call.1} parent=5 // pred_region
        %s1524 = ssub.s32 %s18, 2
        // Predicated region
        $region65: #{tpu_custom_call.1} parent=63 // pred_check
          %p1525 = pneg %p178
        $region66: #{tpu_custom_call.1} parent=63 // pred_check_branch
          %1527 = sbr.rel (%p1525) target = $region68
        $region67: #{tpu_custom_call.1} parent=63 // pred_region
          %s1528 = sand.u32 %s163, 1
          %s1529 = scalar_lea.sflag [#allocation6], %s1528
          %s1530 = sand.u32 %s163, 1
          %s1531 = smul.addr %s1530, 8
          %s1532 = scalar_lea.vmem [#allocation10], %s1531
          %1533 = dma.done %s1529, 128
        $region68: #{tpu_custom_call.1} parent=63 // pred_fallthru
          _
      $region64: #{tpu_custom_call.1} parent=5 // pred_fallthru
        _
    $region6: #{tpu_custom_call.1} parent=1 // loop_footer
      %s22 = sadd.s32 1, %s18
    $region7: #{tpu_custom_call.1} parent=1 // loop_footer_branch
      %17 = sbr.rel target = $region3
    $region8: #{tpu_custom_call.1} parent=1 // loop_exit
      _
    %1534 = vsyncpa [#allocation5], 1
    %s1535 = scalar_lea.sflag [#allocation5], 1
    %1536 = vsyncpa %s1535, 1
    %1537 = vsyncpa [#allocation8], 1
    %1538 = vsyncpa [#allocation6], 1
    %s1539 = scalar_lea.sflag [#allocation6], 1
    %1540 = vsyncpa %s1539, 1

</llo_original>
